<compile_context>
chip_gen: v7x
topology: tpu7x:2x2x1
jax: 0.10.0
libtpu: 0.0.40
codegen_flags: <defaults>
</compile_context>

<pallas_src>
import jax
import jax.numpy as jnp
from jax.experimental import pallas as pl
from jax.experimental.pallas import tpu as pltpu

# ---- model hyper-parameters (small synthetic run) ----
VOCAB = 128          # vocab_size (shrunk)
EMBED = 32           # embed_size
HID = 32             # num_hiddens
LAYERS = 2           # num_layers (hard-coded 2-layer GRU below)
B = 2                # batch
T_SEQ = 8            # sequence length


def seq2seq_encoder(X_tokens, p):
    """Mirrors Seq2SeqEncoder.forward (inference). Returns (output, state)."""
    Bb, T = X_tokens.shape
    V, E = p["embedding"].shape
    H = p["Whh0"].shape[0]
    L = LAYERS

    # ---- wrapper-side layout plumbing (free): time-major flattened token ids
    ids_tm = jnp.transpose(X_tokens, (1, 0)).reshape(T * Bb, 1).astype(jnp.int32)

    # ---- one-time weight prep: block-diag hidden-side weight, fused hidden bias
    whh_bd = jnp.zeros((2 * H, 6 * H), jnp.float32)
    whh_bd = whh_bd.at[:H, :3 * H].set(p["Whh0"]).at[H:, 3 * H:].set(p["Whh1"])
    bhh_cat = jnp.concatenate([p["bhh0"], p["bhh1"]], axis=1)          # (1, 6H)

    def kernel(ids_ref, emb_ref, wih0_ref, bih0_ref, wih1_ref, bih1_ref,
               whh_ref, bhh_ref, out_ref, state_ref):
        # ---- embedding gather fused in-kernel as a one-hot matmul (MXU) ----
        ids = ids_ref[...]                                            # (T*B, 1) i32
        lane = jax.lax.broadcasted_iota(jnp.int32, (T * Bb, V), 1)    # (T*B, V)
        one_hot = (lane == ids).astype(jnp.float32)
        x = jnp.dot(one_hot, emb_ref[...],
                    preferred_element_type=jnp.float32)               # (T*B, E)

        # ---- hoisted, time-invariant: layer-0 x-side gate pre-activation ----
        gi0_all = jnp.dot(x, wih0_ref[...],
                          preferred_element_type=jnp.float32) + bih0_ref[...]

        # ---- hoisted bias broadcasts (no per-step broadcast_in_dim) ----
        bih1 = jnp.broadcast_to(bih1_ref[...], (Bb, 3 * H))
        bhh = jnp.broadcast_to(bhh_ref[...], (Bb, 6 * H))
        whh = whh_ref[...]                                            # (2H, 6H)
        wih1 = wih1_ref[...]                                          # (H, 3H)

        # nn.GRU with no initial state starts from zeros; carries live in vregs.
        h0 = jnp.zeros((Bb, H), jnp.float32)
        h1 = jnp.zeros((Bb, H), jnp.float32)
        outs = []

        # Static Python loop (T is tiny): static slices, register carries.
        for t in range(T):
            gi0 = gi0_all[t * Bb:(t + 1) * Bb]                        # static slice

            # fused hidden-side matmul for both layers (block-diag weights);
            # uses only previous-step state, so the fusion is exact.
            h_cat = jnp.concatenate([h0, h1], axis=1)                 # (B, 2H)
            gh = jnp.dot(h_cat, whh,
                         preferred_element_type=jnp.float32) + bhh    # (B, 6H)
            gh0 = gh[:, :3 * H]
            gh1 = gh[:, 3 * H:]

            # ---- layer 0 ----
            rz0 = jax.nn.sigmoid(gi0[:, :2 * H] + gh0[:, :2 * H])     # one EUP push
            r0, z0 = rz0[:, :H], rz0[:, H:]
            n0 = jnp.tanh(gi0[:, 2 * H:] + r0 * gh0[:, 2 * H:])
            h0_new = (1.0 - z0) * n0 + z0 * h0

            # TODO(synk): inter-layer GRU dropout omitted (inference / eval mode).
            # ---- layer 1 (input is h0_new; x-side matmul cannot be hoisted) ----
            gi1 = jnp.dot(h0_new, wih1,
                          preferred_element_type=jnp.float32) + bih1
            rz1 = jax.nn.sigmoid(gi1[:, :2 * H] + gh1[:, :2 * H])
            r1, z1 = rz1[:, :H], rz1[:, H:]
            n1 = jnp.tanh(gi1[:, 2 * H:] + r1 * gh1[:, 2 * H:])
            h1_new = (1.0 - z1) * n1 + z1 * h1

            h0, h1 = h0_new, h1_new
            outs.append(h1_new)

        # Lane-dense slabs, written exactly once each after the recurrence.
        out_ref[...] = jnp.concatenate(outs, axis=0)                  # (T*B, H)
        state_ref[...] = jnp.concatenate([h0, h1], axis=0)            # (L*B, H)

    def full(shape):
        return pl.BlockSpec(shape, lambda i, _n=len(shape): (0,) * _n)

    in_specs = [
        full((T * Bb, 1)),                    # token ids (time-major, flattened)
        full((V, E)),                         # embedding table
        full((E, 3 * H)), full((1, 3 * H)),   # Wih0, bih0
        full((H, 3 * H)), full((1, 3 * H)),   # Wih1, bih1
        full((2 * H, 6 * H)),                 # blockdiag(Whh0, Whh1)
        full((1, 6 * H)),                     # [bhh0 | bhh1]
    ]
    out_specs = [
        full((T * Bb, H)),                    # GRU outputs (flattened time-major)
        full((L * Bb, H)),                    # final hidden state (flattened)
    ]
    out_shape = [
        jax.ShapeDtypeStruct((T * Bb, H), jnp.float32),
        jax.ShapeDtypeStruct((L * Bb, H), jnp.float32),
    ]

    fn = pl.pallas_call(
        kernel,
        out_shape=out_shape,
        grid_spec=pltpu.PrefetchScalarGridSpec(
            num_scalar_prefetch=0,
            grid=(1,),                        # single invocation; recurrence is
            in_specs=in_specs,                # a fully static in-kernel loop
            out_specs=out_specs,
        ),
        compiler_params=pltpu.CompilerParams(
            dimension_semantics=("arbitrary",)),
    )

    out_flat, state_flat = fn(
        ids_tm, p["embedding"],
        p["Wih0"], p["bih0"], p["Wih1"], p["bih1"],
        whh_bd, bhh_cat,
    )
    # Free row-major reshapes back to the PyTorch shapes.
    output = out_flat.reshape(T, Bb, H)
    state = state_flat.reshape(L, Bb, H)
    return output, state


# ---------------- pure-JAX reference (for a sanity check) ----------------
def reference_forward(X_tokens, p):
    emb = p["embedding"][X_tokens]
    x_seq = jnp.transpose(emb, (1, 0, 2))           # (T, B, E)
    Tt, Bb, E = x_seq.shape
    H = p["Whh0"].shape[0]
    h = jnp.zeros((LAYERS, Bb, H), jnp.float32)
    outs = []

    def cell(xl, hh, wih, whh, bih, bhh):
        gi = xl @ wih + bih[0]
        gh = hh @ whh + bhh[0]
        r = jax.nn.sigmoid(gi[:, :H] + gh[:, :H])
        z = jax.nn.sigmoid(gi[:, H:2 * H] + gh[:, H:2 * H])
        n = jnp.tanh(gi[:, 2 * H:] + r * gh[:, 2 * H:])
        return (1.0 - z) * n + z * hh

    for x in x_seq:
        h0n = cell(x, h[0], p["Wih0"], p["Whh0"], p["bih0"], p["bhh0"])
        h1n = cell(h0n, h[1], p["Wih1"], p["Whh1"], p["bih1"], p["bhh1"])
        h = jnp.stack([h0n, h1n])
        outs.append(h1n)
    return jnp.stack(outs), h                       # (T, B, H), (L, B, H)


def init_params(key):
    ks = jax.random.split(key, 12)
    s = 0.1
    p = {
        "embedding": jax.random.normal(ks[0], (VOCAB, EMBED), jnp.float32) * 0.1,
        "Wih0": jax.random.normal(ks[1], (EMBED, 3 * HID), jnp.float32) * s,
        "Whh0": jax.random.normal(ks[2], (HID, 3 * HID), jnp.float32) * s,
        "bih0": jax.random.normal(ks[3], (1, 3 * HID), jnp.float32) * s,
        "bhh0": jax.random.normal(ks[4], (1, 3 * HID), jnp.float32) * s,
        "Wih1": jax.random.normal(ks[5], (HID, 3 * HID), jnp.float32) * s,
        "Whh1": jax.random.normal(ks[6], (HID, 3 * HID), jnp.float32) * s,
        "bih1": jax.random.normal(ks[7], (1, 3 * HID), jnp.float32) * s,
        "bhh1": jax.random.normal(ks[8], (1, 3 * HID), jnp.float32) * s,
    }
    return p, ks[9]


if __name__ == "__main__":
    key = jax.random.PRNGKey(0)
    params, k_tok = init_params(key)

    # synthetic token inputs, batch-major (B, T) as in the PyTorch forward
    X_tokens = jax.random.randint(k_tok, (B, T_SEQ), 0, VOCAB)

    output, state = seq2seq_encoder(X_tokens, params)
    output = jax.block_until_ready(output)
    state = jax.block_until_ready(state)

    # sanity check against the pure-JAX reference
    ref_out, ref_state = reference_forward(X_tokens, params)
    err_o = float(jnp.max(jnp.abs(output - ref_out)))
    err_s = float(jnp.max(jnp.abs(state - ref_state)))
    assert output.shape == (T_SEQ, B, HID)
    assert state.shape == (LAYERS, B, HID)
    assert err_o < 1e-4 and err_s < 1e-4, (err_o, err_s)

    print("KERNEL_OK")
</pallas_src>

<mosaic_0001>
module attributes {stable_mosaic.version = 11 : i64} {
  func.func @kernel(%arg0: i32, %arg1: memref<16x1xi32, #tpu.memory_space<vmem>>, %arg2: memref<128x32xf32, #tpu.memory_space<vmem>>, %arg3: memref<32x96xf32, #tpu.memory_space<vmem>>, %arg4: memref<1x96xf32, #tpu.memory_space<vmem>>, %arg5: memref<32x96xf32, #tpu.memory_space<vmem>>, %arg6: memref<1x96xf32, #tpu.memory_space<vmem>>, %arg7: memref<64x192xf32, #tpu.memory_space<vmem>>, %arg8: memref<1x192xf32, #tpu.memory_space<vmem>>, %arg9: memref<16x32xf32, #tpu.memory_space<vmem>>, %arg10: memref<4x32xf32, #tpu.memory_space<vmem>>) attributes {dimension_semantics = [#tpu.dimension_semantics<arbitrary>], iteration_bounds = array<i64: 1>, scalar_prefetch = 0 : i64, scratch_operands = 0 : i64, tpu.core_type = #tpu.core_type<tc>, window_params = [{pipeline_mode = #tpu.pipeline_mode<synchronous>, transform_indices = @transform_0, window_bounds = array<i64: 16, 1>}, {pipeline_mode = #tpu.pipeline_mode<synchronous>, transform_indices = @transform_1, window_bounds = array<i64: 128, 32>}, {pipeline_mode = #tpu.pipeline_mode<synchronous>, transform_indices = @transform_2, window_bounds = array<i64: 32, 96>}, {pipeline_mode = #tpu.pipeline_mode<synchronous>, transform_indices = @transform_3, window_bounds = array<i64: 1, 96>}, {pipeline_mode = #tpu.pipeline_mode<synchronous>, transform_indices = @transform_4, window_bounds = array<i64: 32, 96>}, {pipeline_mode = #tpu.pipeline_mode<synchronous>, transform_indices = @transform_5, window_bounds = array<i64: 1, 96>}, {pipeline_mode = #tpu.pipeline_mode<synchronous>, transform_indices = @transform_6, window_bounds = array<i64: 64, 192>}, {pipeline_mode = #tpu.pipeline_mode<synchronous>, transform_indices = @transform_7, window_bounds = array<i64: 1, 192>}, {pipeline_mode = #tpu.pipeline_mode<synchronous>, transform_indices = @transform_8, window_bounds = array<i64: 16, 32>}, {pipeline_mode = #tpu.pipeline_mode<synchronous>, transform_indices = @transform_9, window_bounds = array<i64: 4, 32>}]} {
    %c0 = arith.constant 0 : index
    %c0_0 = arith.constant 0 : index
    %0 = vector.load %arg1[%c0, %c0_0] : memref<16x1xi32, #tpu.memory_space<vmem>>, vector<16x1xi32>
    %1 = tpu.iota {dimensions = array<i32: 1>} : vector<16x128xi32>
    %2 = vector.broadcast %0 : vector<16x1xi32> to vector<16x128xi32>
    %3 = arith.cmpi eq, %1, %2 : vector<16x128xi32>
    %4 = arith.extui %3 : vector<16x128xi1> to vector<16x128xi32>
    %5 = arith.sitofp %4 : vector<16x128xi32> to vector<16x128xf32>
    %c0_1 = arith.constant 0 : index
    %c0_2 = arith.constant 0 : index
    %6 = vector.load %arg2[%c0_1, %c0_2] : memref<128x32xf32, #tpu.memory_space<vmem>>, vector<128x32xf32>
    %cst = arith.constant dense<0.000000e+00> : vector<16x32xf32>
    %7 = tpu.matmul %5, %6, %cst {dimension_numbers = #tpu.dot_dimension_numbers<[1], [0], [0], [1], [0, 0, 1, 1], [], []>} : vector<16x128xf32>, vector<128x32xf32>, vector<16x32xf32> -> vector<16x32xf32>
    %c0_3 = arith.constant 0 : index
    %c0_4 = arith.constant 0 : index
    %8 = vector.load %arg3[%c0_3, %c0_4] : memref<32x96xf32, #tpu.memory_space<vmem>>, vector<32x96xf32>
    %cst_5 = arith.constant dense<0.000000e+00> : vector<16x96xf32>
    %9 = tpu.matmul %7, %8, %cst_5 {dimension_numbers = #tpu.dot_dimension_numbers<[1], [0], [0], [1], [0, 0, 1, 1], [], []>} : vector<16x32xf32>, vector<32x96xf32>, vector<16x96xf32> -> vector<16x96xf32>
    %c0_6 = arith.constant 0 : index
    %c0_7 = arith.constant 0 : index
    %10 = vector.load %arg4[%c0_6, %c0_7] : memref<1x96xf32, #tpu.memory_space<vmem>>, vector<1x96xf32>
    %11 = vector.broadcast %10 : vector<1x96xf32> to vector<16x96xf32>
    %12 = arith.addf %9, %11 : vector<16x96xf32>
    %c0_8 = arith.constant 0 : index
    %c0_9 = arith.constant 0 : index
    %13 = vector.load %arg6[%c0_8, %c0_9] : memref<1x96xf32, #tpu.memory_space<vmem>>, vector<1x96xf32>
    %14 = vector.shape_cast %13 : vector<1x96xf32> to vector<1x96xf32>
    %15 = vector.broadcast %14 : vector<1x96xf32> to vector<2x96xf32>
    %c0_10 = arith.constant 0 : index
    %c0_11 = arith.constant 0 : index
    %16 = vector.load %arg8[%c0_10, %c0_11] : memref<1x192xf32, #tpu.memory_space<vmem>>, vector<1x192xf32>
    %17 = vector.shape_cast %16 : vector<1x192xf32> to vector<1x192xf32>
    %18 = vector.broadcast %17 : vector<1x192xf32> to vector<2x192xf32>
    %c0_12 = arith.constant 0 : index
    %c0_13 = arith.constant 0 : index
    %19 = vector.load %arg7[%c0_12, %c0_13] : memref<64x192xf32, #tpu.memory_space<vmem>>, vector<64x192xf32>
    %c0_14 = arith.constant 0 : index
    %c0_15 = arith.constant 0 : index
    %20 = vector.load %arg5[%c0_14, %c0_15] : memref<32x96xf32, #tpu.memory_space<vmem>>, vector<32x96xf32>
    %cst_16 = arith.constant 0.000000e+00 : f32
    %21 = vector.broadcast %cst_16 : f32 to vector<2x32xf32>
    %cst_17 = arith.constant 0.000000e+00 : f32
    %22 = vector.broadcast %cst_17 : f32 to vector<2x32xf32>
    %23 = vector.extract_strided_slice %12 {offsets = [0, 0], sizes = [2, 96], strides = [1, 1]} : vector<16x96xf32> to vector<2x96xf32>
    %24 = tpu.concatenate %21, %22 in 1 : vector<2x32xf32>, vector<2x32xf32> -> vector<2x64xf32>
    %cst_18 = arith.constant dense<0.000000e+00> : vector<2x192xf32>
    %25 = tpu.matmul %24, %19, %cst_18 {dimension_numbers = #tpu.dot_dimension_numbers<[1], [0], [0], [1], [0, 0, 1, 1], [], []>} : vector<2x64xf32>, vector<64x192xf32>, vector<2x192xf32> -> vector<2x192xf32>
    %26 = arith.addf %25, %18 : vector<2x192xf32>
    %27 = vector.extract_strided_slice %26 {offsets = [0, 0], sizes = [2, 96], strides = [1, 1]} : vector<2x192xf32> to vector<2x96xf32>
    %28 = vector.extract_strided_slice %26 {offsets = [0, 96], sizes = [2, 96], strides = [1, 1]} : vector<2x192xf32> to vector<2x96xf32>
    %29 = vector.extract_strided_slice %23 {offsets = [0, 0], sizes = [2, 64], strides = [1, 1]} : vector<2x96xf32> to vector<2x64xf32>
    %30 = vector.extract_strided_slice %27 {offsets = [0, 0], sizes = [2, 64], strides = [1, 1]} : vector<2x96xf32> to vector<2x64xf32>
    %31 = arith.addf %29, %30 : vector<2x64xf32>
    %32 = arith.negf %31 : vector<2x64xf32>
    %33 = math.exp %32 : vector<2x64xf32>
    %cst_19 = arith.constant 1.000000e+00 : f32
    %34 = vector.broadcast %cst_19 : f32 to vector<2x64xf32>
    %35 = arith.addf %34, %33 : vector<2x64xf32>
    %36 = arith.divf %34, %35 : vector<2x64xf32>
    %37 = vector.extract_strided_slice %36 {offsets = [0, 0], sizes = [2, 32], strides = [1, 1]} : vector<2x64xf32> to vector<2x32xf32>
    %38 = vector.extract_strided_slice %36 {offsets = [0, 32], sizes = [2, 32], strides = [1, 1]} : vector<2x64xf32> to vector<2x32xf32>
    %39 = vector.extract_strided_slice %23 {offsets = [0, 64], sizes = [2, 32], strides = [1, 1]} : vector<2x96xf32> to vector<2x32xf32>
    %40 = vector.extract_strided_slice %27 {offsets = [0, 64], sizes = [2, 32], strides = [1, 1]} : vector<2x96xf32> to vector<2x32xf32>
    %41 = arith.mulf %37, %40 : vector<2x32xf32>
    %42 = arith.addf %39, %41 : vector<2x32xf32>
    %43 = math.tanh %42 : vector<2x32xf32>
    %cst_20 = arith.constant 1.000000e+00 : f32
    %44 = vector.broadcast %cst_20 : f32 to vector<2x32xf32>
    %45 = arith.subf %44, %38 : vector<2x32xf32>
    %46 = arith.mulf %45, %43 : vector<2x32xf32>
    %47 = arith.mulf %38, %21 : vector<2x32xf32>
    %48 = arith.addf %46, %47 : vector<2x32xf32>
    %cst_21 = arith.constant dense<0.000000e+00> : vector<2x96xf32>
    %49 = tpu.matmul %48, %20, %cst_21 {dimension_numbers = #tpu.dot_dimension_numbers<[1], [0], [0], [1], [0, 0, 1, 1], [], []>} : vector<2x32xf32>, vector<32x96xf32>, vector<2x96xf32> -> vector<2x96xf32>
    %50 = arith.addf %49, %15 : vector<2x96xf32>
    %51 = vector.extract_strided_slice %50 {offsets = [0, 0], sizes = [2, 64], strides = [1, 1]} : vector<2x96xf32> to vector<2x64xf32>
    %52 = vector.extract_strided_slice %28 {offsets = [0, 0], sizes = [2, 64], strides = [1, 1]} : vector<2x96xf32> to vector<2x64xf32>
    %53 = arith.addf %51, %52 : vector<2x64xf32>
    %54 = arith.negf %53 : vector<2x64xf32>
    %55 = math.exp %54 : vector<2x64xf32>
    %cst_22 = arith.constant 1.000000e+00 : f32
    %56 = vector.broadcast %cst_22 : f32 to vector<2x64xf32>
    %57 = arith.addf %56, %55 : vector<2x64xf32>
    %58 = arith.divf %56, %57 : vector<2x64xf32>
    %59 = vector.extract_strided_slice %58 {offsets = [0, 0], sizes = [2, 32], strides = [1, 1]} : vector<2x64xf32> to vector<2x32xf32>
    %60 = vector.extract_strided_slice %58 {offsets = [0, 32], sizes = [2, 32], strides = [1, 1]} : vector<2x64xf32> to vector<2x32xf32>
    %61 = vector.extract_strided_slice %50 {offsets = [0, 64], sizes = [2, 32], strides = [1, 1]} : vector<2x96xf32> to vector<2x32xf32>
    %62 = vector.extract_strided_slice %28 {offsets = [0, 64], sizes = [2, 32], strides = [1, 1]} : vector<2x96xf32> to vector<2x32xf32>
    %63 = arith.mulf %59, %62 : vector<2x32xf32>
    %64 = arith.addf %61, %63 : vector<2x32xf32>
    %65 = math.tanh %64 : vector<2x32xf32>
    %cst_23 = arith.constant 1.000000e+00 : f32
    %66 = vector.broadcast %cst_23 : f32 to vector<2x32xf32>
    %67 = arith.subf %66, %60 : vector<2x32xf32>
    %68 = arith.mulf %67, %65 : vector<2x32xf32>
    %69 = arith.mulf %60, %22 : vector<2x32xf32>
    %70 = arith.addf %68, %69 : vector<2x32xf32>
    %71 = vector.extract_strided_slice %12 {offsets = [2, 0], sizes = [2, 96], strides = [1, 1]} : vector<16x96xf32> to vector<2x96xf32>
    %72 = tpu.concatenate %48, %70 in 1 : vector<2x32xf32>, vector<2x32xf32> -> vector<2x64xf32>
    %cst_24 = arith.constant dense<0.000000e+00> : vector<2x192xf32>
    %73 = tpu.matmul %72, %19, %cst_24 {dimension_numbers = #tpu.dot_dimension_numbers<[1], [0], [0], [1], [0, 0, 1, 1], [], []>} : vector<2x64xf32>, vector<64x192xf32>, vector<2x192xf32> -> vector<2x192xf32>
    %74 = arith.addf %73, %18 : vector<2x192xf32>
    %75 = vector.extract_strided_slice %74 {offsets = [0, 0], sizes = [2, 96], strides = [1, 1]} : vector<2x192xf32> to vector<2x96xf32>
    %76 = vector.extract_strided_slice %74 {offsets = [0, 96], sizes = [2, 96], strides = [1, 1]} : vector<2x192xf32> to vector<2x96xf32>
    %77 = vector.extract_strided_slice %71 {offsets = [0, 0], sizes = [2, 64], strides = [1, 1]} : vector<2x96xf32> to vector<2x64xf32>
    %78 = vector.extract_strided_slice %75 {offsets = [0, 0], sizes = [2, 64], strides = [1, 1]} : vector<2x96xf32> to vector<2x64xf32>
    %79 = arith.addf %77, %78 : vector<2x64xf32>
    %80 = arith.negf %79 : vector<2x64xf32>
    %81 = math.exp %80 : vector<2x64xf32>
    %cst_25 = arith.constant 1.000000e+00 : f32
    %82 = vector.broadcast %cst_25 : f32 to vector<2x64xf32>
    %83 = arith.addf %82, %81 : vector<2x64xf32>
    %84 = arith.divf %82, %83 : vector<2x64xf32>
    %85 = vector.extract_strided_slice %84 {offsets = [0, 0], sizes = [2, 32], strides = [1, 1]} : vector<2x64xf32> to vector<2x32xf32>
    %86 = vector.extract_strided_slice %84 {offsets = [0, 32], sizes = [2, 32], strides = [1, 1]} : vector<2x64xf32> to vector<2x32xf32>
    %87 = vector.extract_strided_slice %71 {offsets = [0, 64], sizes = [2, 32], strides = [1, 1]} : vector<2x96xf32> to vector<2x32xf32>
    %88 = vector.extract_strided_slice %75 {offsets = [0, 64], sizes = [2, 32], strides = [1, 1]} : vector<2x96xf32> to vector<2x32xf32>
    %89 = arith.mulf %85, %88 : vector<2x32xf32>
    %90 = arith.addf %87, %89 : vector<2x32xf32>
    %91 = math.tanh %90 : vector<2x32xf32>
    %cst_26 = arith.constant 1.000000e+00 : f32
    %92 = vector.broadcast %cst_26 : f32 to vector<2x32xf32>
    %93 = arith.subf %92, %86 : vector<2x32xf32>
    %94 = arith.mulf %93, %91 : vector<2x32xf32>
    %95 = arith.mulf %86, %48 : vector<2x32xf32>
    %96 = arith.addf %94, %95 : vector<2x32xf32>
    %cst_27 = arith.constant dense<0.000000e+00> : vector<2x96xf32>
    %97 = tpu.matmul %96, %20, %cst_27 {dimension_numbers = #tpu.dot_dimension_numbers<[1], [0], [0], [1], [0, 0, 1, 1], [], []>} : vector<2x32xf32>, vector<32x96xf32>, vector<2x96xf32> -> vector<2x96xf32>
    %98 = arith.addf %97, %15 : vector<2x96xf32>
    %99 = vector.extract_strided_slice %98 {offsets = [0, 0], sizes = [2, 64], strides = [1, 1]} : vector<2x96xf32> to vector<2x64xf32>
    %100 = vector.extract_strided_slice %76 {offsets = [0, 0], sizes = [2, 64], strides = [1, 1]} : vector<2x96xf32> to vector<2x64xf32>
    %101 = arith.addf %99, %100 : vector<2x64xf32>
    %102 = arith.negf %101 : vector<2x64xf32>
    %103 = math.exp %102 : vector<2x64xf32>
    %cst_28 = arith.constant 1.000000e+00 : f32
    %104 = vector.broadcast %cst_28 : f32 to vector<2x64xf32>
    %105 = arith.addf %104, %103 : vector<2x64xf32>
    %106 = arith.divf %104, %105 : vector<2x64xf32>
    %107 = vector.extract_strided_slice %106 {offsets = [0, 0], sizes = [2, 32], strides = [1, 1]} : vector<2x64xf32> to vector<2x32xf32>
    %108 = vector.extract_strided_slice %106 {offsets = [0, 32], sizes = [2, 32], strides = [1, 1]} : vector<2x64xf32> to vector<2x32xf32>
    %109 = vector.extract_strided_slice %98 {offsets = [0, 64], sizes = [2, 32], strides = [1, 1]} : vector<2x96xf32> to vector<2x32xf32>
    %110 = vector.extract_strided_slice %76 {offsets = [0, 64], sizes = [2, 32], strides = [1, 1]} : vector<2x96xf32> to vector<2x32xf32>
    %111 = arith.mulf %107, %110 : vector<2x32xf32>
    %112 = arith.addf %109, %111 : vector<2x32xf32>
    %113 = math.tanh %112 : vector<2x32xf32>
    %cst_29 = arith.constant 1.000000e+00 : f32
    %114 = vector.broadcast %cst_29 : f32 to vector<2x32xf32>
    %115 = arith.subf %114, %108 : vector<2x32xf32>
    %116 = arith.mulf %115, %113 : vector<2x32xf32>
    %117 = arith.mulf %108, %70 : vector<2x32xf32>
    %118 = arith.addf %116, %117 : vector<2x32xf32>
    %119 = vector.extract_strided_slice %12 {offsets = [4, 0], sizes = [2, 96], strides = [1, 1]} : vector<16x96xf32> to vector<2x96xf32>
    %120 = tpu.concatenate %96, %118 in 1 : vector<2x32xf32>, vector<2x32xf32> -> vector<2x64xf32>
    %cst_30 = arith.constant dense<0.000000e+00> : vector<2x192xf32>
    %121 = tpu.matmul %120, %19, %cst_30 {dimension_numbers = #tpu.dot_dimension_numbers<[1], [0], [0], [1], [0, 0, 1, 1], [], []>} : vector<2x64xf32>, vector<64x192xf32>, vector<2x192xf32> -> vector<2x192xf32>
    %122 = arith.addf %121, %18 : vector<2x192xf32>
    %123 = vector.extract_strided_slice %122 {offsets = [0, 0], sizes = [2, 96], strides = [1, 1]} : vector<2x192xf32> to vector<2x96xf32>
    %124 = vector.extract_strided_slice %122 {offsets = [0, 96], sizes = [2, 96], strides = [1, 1]} : vector<2x192xf32> to vector<2x96xf32>
    %125 = vector.extract_strided_slice %119 {offsets = [0, 0], sizes = [2, 64], strides = [1, 1]} : vector<2x96xf32> to vector<2x64xf32>
    %126 = vector.extract_strided_slice %123 {offsets = [0, 0], sizes = [2, 64], strides = [1, 1]} : vector<2x96xf32> to vector<2x64xf32>
    %127 = arith.addf %125, %126 : vector<2x64xf32>
    %128 = arith.negf %127 : vector<2x64xf32>
    %129 = math.exp %128 : vector<2x64xf32>
    %cst_31 = arith.constant 1.000000e+00 : f32
    %130 = vector.broadcast %cst_31 : f32 to vector<2x64xf32>
    %131 = arith.addf %130, %129 : vector<2x64xf32>
    %132 = arith.divf %130, %131 : vector<2x64xf32>
    %133 = vector.extract_strided_slice %132 {offsets = [0, 0], sizes = [2, 32], strides = [1, 1]} : vector<2x64xf32> to vector<2x32xf32>
    %134 = vector.extract_strided_slice %132 {offsets = [0, 32], sizes = [2, 32], strides = [1, 1]} : vector<2x64xf32> to vector<2x32xf32>
    %135 = vector.extract_strided_slice %119 {offsets = [0, 64], sizes = [2, 32], strides = [1, 1]} : vector<2x96xf32> to vector<2x32xf32>
    %136 = vector.extract_strided_slice %123 {offsets = [0, 64], sizes = [2, 32], strides = [1, 1]} : vector<2x96xf32> to vector<2x32xf32>
    %137 = arith.mulf %133, %136 : vector<2x32xf32>
    %138 = arith.addf %135, %137 : vector<2x32xf32>
    %139 = math.tanh %138 : vector<2x32xf32>
    %cst_32 = arith.constant 1.000000e+00 : f32
    %140 = vector.broadcast %cst_32 : f32 to vector<2x32xf32>
    %141 = arith.subf %140, %134 : vector<2x32xf32>
    %142 = arith.mulf %141, %139 : vector<2x32xf32>
    %143 = arith.mulf %134, %96 : vector<2x32xf32>
    %144 = arith.addf %142, %143 : vector<2x32xf32>
    %cst_33 = arith.constant dense<0.000000e+00> : vector<2x96xf32>
    %145 = tpu.matmul %144, %20, %cst_33 {dimension_numbers = #tpu.dot_dimension_numbers<[1], [0], [0], [1], [0, 0, 1, 1], [], []>} : vector<2x32xf32>, vector<32x96xf32>, vector<2x96xf32> -> vector<2x96xf32>
    %146 = arith.addf %145, %15 : vector<2x96xf32>
    %147 = vector.extract_strided_slice %146 {offsets = [0, 0], sizes = [2, 64], strides = [1, 1]} : vector<2x96xf32> to vector<2x64xf32>
    %148 = vector.extract_strided_slice %124 {offsets = [0, 0], sizes = [2, 64], strides = [1, 1]} : vector<2x96xf32> to vector<2x64xf32>
    %149 = arith.addf %147, %148 : vector<2x64xf32>
    %150 = arith.negf %149 : vector<2x64xf32>
    %151 = math.exp %150 : vector<2x64xf32>
    %cst_34 = arith.constant 1.000000e+00 : f32
    %152 = vector.broadcast %cst_34 : f32 to vector<2x64xf32>
    %153 = arith.addf %152, %151 : vector<2x64xf32>
    %154 = arith.divf %152, %153 : vector<2x64xf32>
    %155 = vector.extract_strided_slice %154 {offsets = [0, 0], sizes = [2, 32], strides = [1, 1]} : vector<2x64xf32> to vector<2x32xf32>
    %156 = vector.extract_strided_slice %154 {offsets = [0, 32], sizes = [2, 32], strides = [1, 1]} : vector<2x64xf32> to vector<2x32xf32>
    %157 = vector.extract_strided_slice %146 {offsets = [0, 64], sizes = [2, 32], strides = [1, 1]} : vector<2x96xf32> to vector<2x32xf32>
    %158 = vector.extract_strided_slice %124 {offsets = [0, 64], sizes = [2, 32], strides = [1, 1]} : vector<2x96xf32> to vector<2x32xf32>
    %159 = arith.mulf %155, %158 : vector<2x32xf32>
    %160 = arith.addf %157, %159 : vector<2x32xf32>
    %161 = math.tanh %160 : vector<2x32xf32>
    %cst_35 = arith.constant 1.000000e+00 : f32
    %162 = vector.broadcast %cst_35 : f32 to vector<2x32xf32>
    %163 = arith.subf %162, %156 : vector<2x32xf32>
    %164 = arith.mulf %163, %161 : vector<2x32xf32>
    %165 = arith.mulf %156, %118 : vector<2x32xf32>
    %166 = arith.addf %164, %165 : vector<2x32xf32>
    %167 = vector.extract_strided_slice %12 {offsets = [6, 0], sizes = [2, 96], strides = [1, 1]} : vector<16x96xf32> to vector<2x96xf32>
    %168 = tpu.concatenate %144, %166 in 1 : vector<2x32xf32>, vector<2x32xf32> -> vector<2x64xf32>
    %cst_36 = arith.constant dense<0.000000e+00> : vector<2x192xf32>
    %169 = tpu.matmul %168, %19, %cst_36 {dimension_numbers = #tpu.dot_dimension_numbers<[1], [0], [0], [1], [0, 0, 1, 1], [], []>} : vector<2x64xf32>, vector<64x192xf32>, vector<2x192xf32> -> vector<2x192xf32>
    %170 = arith.addf %169, %18 : vector<2x192xf32>
    %171 = vector.extract_strided_slice %170 {offsets = [0, 0], sizes = [2, 96], strides = [1, 1]} : vector<2x192xf32> to vector<2x96xf32>
    %172 = vector.extract_strided_slice %170 {offsets = [0, 96], sizes = [2, 96], strides = [1, 1]} : vector<2x192xf32> to vector<2x96xf32>
    %173 = vector.extract_strided_slice %167 {offsets = [0, 0], sizes = [2, 64], strides = [1, 1]} : vector<2x96xf32> to vector<2x64xf32>
    %174 = vector.extract_strided_slice %171 {offsets = [0, 0], sizes = [2, 64], strides = [1, 1]} : vector<2x96xf32> to vector<2x64xf32>
    %175 = arith.addf %173, %174 : vector<2x64xf32>
    %176 = arith.negf %175 : vector<2x64xf32>
    %177 = math.exp %176 : vector<2x64xf32>
    %cst_37 = arith.constant 1.000000e+00 : f32
    %178 = vector.broadcast %cst_37 : f32 to vector<2x64xf32>
    %179 = arith.addf %178, %177 : vector<2x64xf32>
    %180 = arith.divf %178, %179 : vector<2x64xf32>
    %181 = vector.extract_strided_slice %180 {offsets = [0, 0], sizes = [2, 32], strides = [1, 1]} : vector<2x64xf32> to vector<2x32xf32>
    %182 = vector.extract_strided_slice %180 {offsets = [0, 32], sizes = [2, 32], strides = [1, 1]} : vector<2x64xf32> to vector<2x32xf32>
    %183 = vector.extract_strided_slice %167 {offsets = [0, 64], sizes = [2, 32], strides = [1, 1]} : vector<2x96xf32> to vector<2x32xf32>
    %184 = vector.extract_strided_slice %171 {offsets = [0, 64], sizes = [2, 32], strides = [1, 1]} : vector<2x96xf32> to vector<2x32xf32>
    %185 = arith.mulf %181, %184 : vector<2x32xf32>
    %186 = arith.addf %183, %185 : vector<2x32xf32>
    %187 = math.tanh %186 : vector<2x32xf32>
    %cst_38 = arith.constant 1.000000e+00 : f32
    %188 = vector.broadcast %cst_38 : f32 to vector<2x32xf32>
    %189 = arith.subf %188, %182 : vector<2x32xf32>
    %190 = arith.mulf %189, %187 : vector<2x32xf32>
    %191 = arith.mulf %182, %144 : vector<2x32xf32>
    %192 = arith.addf %190, %191 : vector<2x32xf32>
    %cst_39 = arith.constant dense<0.000000e+00> : vector<2x96xf32>
    %193 = tpu.matmul %192, %20, %cst_39 {dimension_numbers = #tpu.dot_dimension_numbers<[1], [0], [0], [1], [0, 0, 1, 1], [], []>} : vector<2x32xf32>, vector<32x96xf32>, vector<2x96xf32> -> vector<2x96xf32>
    %194 = arith.addf %193, %15 : vector<2x96xf32>
    %195 = vector.extract_strided_slice %194 {offsets = [0, 0], sizes = [2, 64], strides = [1, 1]} : vector<2x96xf32> to vector<2x64xf32>
    %196 = vector.extract_strided_slice %172 {offsets = [0, 0], sizes = [2, 64], strides = [1, 1]} : vector<2x96xf32> to vector<2x64xf32>
    %197 = arith.addf %195, %196 : vector<2x64xf32>
    %198 = arith.negf %197 : vector<2x64xf32>
    %199 = math.exp %198 : vector<2x64xf32>
    %cst_40 = arith.constant 1.000000e+00 : f32
    %200 = vector.broadcast %cst_40 : f32 to vector<2x64xf32>
    %201 = arith.addf %200, %199 : vector<2x64xf32>
    %202 = arith.divf %200, %201 : vector<2x64xf32>
    %203 = vector.extract_strided_slice %202 {offsets = [0, 0], sizes = [2, 32], strides = [1, 1]} : vector<2x64xf32> to vector<2x32xf32>
    %204 = vector.extract_strided_slice %202 {offsets = [0, 32], sizes = [2, 32], strides = [1, 1]} : vector<2x64xf32> to vector<2x32xf32>
    %205 = vector.extract_strided_slice %194 {offsets = [0, 64], sizes = [2, 32], strides = [1, 1]} : vector<2x96xf32> to vector<2x32xf32>
    %206 = vector.extract_strided_slice %172 {offsets = [0, 64], sizes = [2, 32], strides = [1, 1]} : vector<2x96xf32> to vector<2x32xf32>
    %207 = arith.mulf %203, %206 : vector<2x32xf32>
    %208 = arith.addf %205, %207 : vector<2x32xf32>
    %209 = math.tanh %208 : vector<2x32xf32>
    %cst_41 = arith.constant 1.000000e+00 : f32
    %210 = vector.broadcast %cst_41 : f32 to vector<2x32xf32>
    %211 = arith.subf %210, %204 : vector<2x32xf32>
    %212 = arith.mulf %211, %209 : vector<2x32xf32>
    %213 = arith.mulf %204, %166 : vector<2x32xf32>
    %214 = arith.addf %212, %213 : vector<2x32xf32>
    %215 = vector.extract_strided_slice %12 {offsets = [8, 0], sizes = [2, 96], strides = [1, 1]} : vector<16x96xf32> to vector<2x96xf32>
    %216 = tpu.concatenate %192, %214 in 1 : vector<2x32xf32>, vector<2x32xf32> -> vector<2x64xf32>
    %cst_42 = arith.constant dense<0.000000e+00> : vector<2x192xf32>
    %217 = tpu.matmul %216, %19, %cst_42 {dimension_numbers = #tpu.dot_dimension_numbers<[1], [0], [0], [1], [0, 0, 1, 1], [], []>} : vector<2x64xf32>, vector<64x192xf32>, vector<2x192xf32> -> vector<2x192xf32>
    %218 = arith.addf %217, %18 : vector<2x192xf32>
    %219 = vector.extract_strided_slice %218 {offsets = [0, 0], sizes = [2, 96], strides = [1, 1]} : vector<2x192xf32> to vector<2x96xf32>
    %220 = vector.extract_strided_slice %218 {offsets = [0, 96], sizes = [2, 96], strides = [1, 1]} : vector<2x192xf32> to vector<2x96xf32>
    %221 = vector.extract_strided_slice %215 {offsets = [0, 0], sizes = [2, 64], strides = [1, 1]} : vector<2x96xf32> to vector<2x64xf32>
    %222 = vector.extract_strided_slice %219 {offsets = [0, 0], sizes = [2, 64], strides = [1, 1]} : vector<2x96xf32> to vector<2x64xf32>
    %223 = arith.addf %221, %222 : vector<2x64xf32>
    %224 = arith.negf %223 : vector<2x64xf32>
    %225 = math.exp %224 : vector<2x64xf32>
    %cst_43 = arith.constant 1.000000e+00 : f32
    %226 = vector.broadcast %cst_43 : f32 to vector<2x64xf32>
    %227 = arith.addf %226, %225 : vector<2x64xf32>
    %228 = arith.divf %226, %227 : vector<2x64xf32>
    %229 = vector.extract_strided_slice %228 {offsets = [0, 0], sizes = [2, 32], strides = [1, 1]} : vector<2x64xf32> to vector<2x32xf32>
    %230 = vector.extract_strided_slice %228 {offsets = [0, 32], sizes = [2, 32], strides = [1, 1]} : vector<2x64xf32> to vector<2x32xf32>
    %231 = vector.extract_strided_slice %215 {offsets = [0, 64], sizes = [2, 32], strides = [1, 1]} : vector<2x96xf32> to vector<2x32xf32>
    %232 = vector.extract_strided_slice %219 {offsets = [0, 64], sizes = [2, 32], strides = [1, 1]} : vector<2x96xf32> to vector<2x32xf32>
    %233 = arith.mulf %229, %232 : vector<2x32xf32>
    %234 = arith.addf %231, %233 : vector<2x32xf32>
    %235 = math.tanh %234 : vector<2x32xf32>
    %cst_44 = arith.constant 1.000000e+00 : f32
    %236 = vector.broadcast %cst_44 : f32 to vector<2x32xf32>
    %237 = arith.subf %236, %230 : vector<2x32xf32>
    %238 = arith.mulf %237, %235 : vector<2x32xf32>
    %239 = arith.mulf %230, %192 : vector<2x32xf32>
    %240 = arith.addf %238, %239 : vector<2x32xf32>
    %cst_45 = arith.constant dense<0.000000e+00> : vector<2x96xf32>
    %241 = tpu.matmul %240, %20, %cst_45 {dimension_numbers = #tpu.dot_dimension_numbers<[1], [0], [0], [1], [0, 0, 1, 1], [], []>} : vector<2x32xf32>, vector<32x96xf32>, vector<2x96xf32> -> vector<2x96xf32>
    %242 = arith.addf %241, %15 : vector<2x96xf32>
    %243 = vector.extract_strided_slice %242 {offsets = [0, 0], sizes = [2, 64], strides = [1, 1]} : vector<2x96xf32> to vector<2x64xf32>
    %244 = vector.extract_strided_slice %220 {offsets = [0, 0], sizes = [2, 64], strides = [1, 1]} : vector<2x96xf32> to vector<2x64xf32>
    %245 = arith.addf %243, %244 : vector<2x64xf32>
    %246 = arith.negf %245 : vector<2x64xf32>
    %247 = math.exp %246 : vector<2x64xf32>
    %cst_46 = arith.constant 1.000000e+00 : f32
    %248 = vector.broadcast %cst_46 : f32 to vector<2x64xf32>
    %249 = arith.addf %248, %247 : vector<2x64xf32>
    %250 = arith.divf %248, %249 : vector<2x64xf32>
    %251 = vector.extract_strided_slice %250 {offsets = [0, 0], sizes = [2, 32], strides = [1, 1]} : vector<2x64xf32> to vector<2x32xf32>
    %252 = vector.extract_strided_slice %250 {offsets = [0, 32], sizes = [2, 32], strides = [1, 1]} : vector<2x64xf32> to vector<2x32xf32>
    %253 = vector.extract_strided_slice %242 {offsets = [0, 64], sizes = [2, 32], strides = [1, 1]} : vector<2x96xf32> to vector<2x32xf32>
    %254 = vector.extract_strided_slice %220 {offsets = [0, 64], sizes = [2, 32], strides = [1, 1]} : vector<2x96xf32> to vector<2x32xf32>
    %255 = arith.mulf %251, %254 : vector<2x32xf32>
    %256 = arith.addf %253, %255 : vector<2x32xf32>
    %257 = math.tanh %256 : vector<2x32xf32>
    %cst_47 = arith.constant 1.000000e+00 : f32
    %258 = vector.broadcast %cst_47 : f32 to vector<2x32xf32>
    %259 = arith.subf %258, %252 : vector<2x32xf32>
    %260 = arith.mulf %259, %257 : vector<2x32xf32>
    %261 = arith.mulf %252, %214 : vector<2x32xf32>
    %262 = arith.addf %260, %261 : vector<2x32xf32>
    %263 = vector.extract_strided_slice %12 {offsets = [10, 0], sizes = [2, 96], strides = [1, 1]} : vector<16x96xf32> to vector<2x96xf32>
    %264 = tpu.concatenate %240, %262 in 1 : vector<2x32xf32>, vector<2x32xf32> -> vector<2x64xf32>
    %cst_48 = arith.constant dense<0.000000e+00> : vector<2x192xf32>
    %265 = tpu.matmul %264, %19, %cst_48 {dimension_numbers = #tpu.dot_dimension_numbers<[1], [0], [0], [1], [0, 0, 1, 1], [], []>} : vector<2x64xf32>, vector<64x192xf32>, vector<2x192xf32> -> vector<2x192xf32>
    %266 = arith.addf %265, %18 : vector<2x192xf32>
    %267 = vector.extract_strided_slice %266 {offsets = [0, 0], sizes = [2, 96], strides = [1, 1]} : vector<2x192xf32> to vector<2x96xf32>
    %268 = vector.extract_strided_slice %266 {offsets = [0, 96], sizes = [2, 96], strides = [1, 1]} : vector<2x192xf32> to vector<2x96xf32>
    %269 = vector.extract_strided_slice %263 {offsets = [0, 0], sizes = [2, 64], strides = [1, 1]} : vector<2x96xf32> to vector<2x64xf32>
    %270 = vector.extract_strided_slice %267 {offsets = [0, 0], sizes = [2, 64], strides = [1, 1]} : vector<2x96xf32> to vector<2x64xf32>
    %271 = arith.addf %269, %270 : vector<2x64xf32>
    %272 = arith.negf %271 : vector<2x64xf32>
    %273 = math.exp %272 : vector<2x64xf32>
    %cst_49 = arith.constant 1.000000e+00 : f32
    %274 = vector.broadcast %cst_49 : f32 to vector<2x64xf32>
    %275 = arith.addf %274, %273 : vector<2x64xf32>
    %276 = arith.divf %274, %275 : vector<2x64xf32>
    %277 = vector.extract_strided_slice %276 {offsets = [0, 0], sizes = [2, 32], strides = [1, 1]} : vector<2x64xf32> to vector<2x32xf32>
    %278 = vector.extract_strided_slice %276 {offsets = [0, 32], sizes = [2, 32], strides = [1, 1]} : vector<2x64xf32> to vector<2x32xf32>
    %279 = vector.extract_strided_slice %263 {offsets = [0, 64], sizes = [2, 32], strides = [1, 1]} : vector<2x96xf32> to vector<2x32xf32>
    %280 = vector.extract_strided_slice %267 {offsets = [0, 64], sizes = [2, 32], strides = [1, 1]} : vector<2x96xf32> to vector<2x32xf32>
    %281 = arith.mulf %277, %280 : vector<2x32xf32>
    %282 = arith.addf %279, %281 : vector<2x32xf32>
    %283 = math.tanh %282 : vector<2x32xf32>
    %cst_50 = arith.constant 1.000000e+00 : f32
    %284 = vector.broadcast %cst_50 : f32 to vector<2x32xf32>
    %285 = arith.subf %284, %278 : vector<2x32xf32>
    %286 = arith.mulf %285, %283 : vector<2x32xf32>
    %287 = arith.mulf %278, %240 : vector<2x32xf32>
    %288 = arith.addf %286, %287 : vector<2x32xf32>
    %cst_51 = arith.constant dense<0.000000e+00> : vector<2x96xf32>
    %289 = tpu.matmul %288, %20, %cst_51 {dimension_numbers = #tpu.dot_dimension_numbers<[1], [0], [0], [1], [0, 0, 1, 1], [], []>} : vector<2x32xf32>, vector<32x96xf32>, vector<2x96xf32> -> vector<2x96xf32>
    %290 = arith.addf %289, %15 : vector<2x96xf32>
    %291 = vector.extract_strided_slice %290 {offsets = [0, 0], sizes = [2, 64], strides = [1, 1]} : vector<2x96xf32> to vector<2x64xf32>
    %292 = vector.extract_strided_slice %268 {offsets = [0, 0], sizes = [2, 64], strides = [1, 1]} : vector<2x96xf32> to vector<2x64xf32>
    %293 = arith.addf %291, %292 : vector<2x64xf32>
    %294 = arith.negf %293 : vector<2x64xf32>
    %295 = math.exp %294 : vector<2x64xf32>
    %cst_52 = arith.constant 1.000000e+00 : f32
    %296 = vector.broadcast %cst_52 : f32 to vector<2x64xf32>
    %297 = arith.addf %296, %295 : vector<2x64xf32>
    %298 = arith.divf %296, %297 : vector<2x64xf32>
    %299 = vector.extract_strided_slice %298 {offsets = [0, 0], sizes = [2, 32], strides = [1, 1]} : vector<2x64xf32> to vector<2x32xf32>
    %300 = vector.extract_strided_slice %298 {offsets = [0, 32], sizes = [2, 32], strides = [1, 1]} : vector<2x64xf32> to vector<2x32xf32>
    %301 = vector.extract_strided_slice %290 {offsets = [0, 64], sizes = [2, 32], strides = [1, 1]} : vector<2x96xf32> to vector<2x32xf32>
    %302 = vector.extract_strided_slice %268 {offsets = [0, 64], sizes = [2, 32], strides = [1, 1]} : vector<2x96xf32> to vector<2x32xf32>
    %303 = arith.mulf %299, %302 : vector<2x32xf32>
    %304 = arith.addf %301, %303 : vector<2x32xf32>
    %305 = math.tanh %304 : vector<2x32xf32>
    %cst_53 = arith.constant 1.000000e+00 : f32
    %306 = vector.broadcast %cst_53 : f32 to vector<2x32xf32>
    %307 = arith.subf %306, %300 : vector<2x32xf32>
    %308 = arith.mulf %307, %305 : vector<2x32xf32>
    %309 = arith.mulf %300, %262 : vector<2x32xf32>
    %310 = arith.addf %308, %309 : vector<2x32xf32>
    %311 = vector.extract_strided_slice %12 {offsets = [12, 0], sizes = [2, 96], strides = [1, 1]} : vector<16x96xf32> to vector<2x96xf32>
    %312 = tpu.concatenate %288, %310 in 1 : vector<2x32xf32>, vector<2x32xf32> -> vector<2x64xf32>
    %cst_54 = arith.constant dense<0.000000e+00> : vector<2x192xf32>
    %313 = tpu.matmul %312, %19, %cst_54 {dimension_numbers = #tpu.dot_dimension_numbers<[1], [0], [0], [1], [0, 0, 1, 1], [], []>} : vector<2x64xf32>, vector<64x192xf32>, vector<2x192xf32> -> vector<2x192xf32>
    %314 = arith.addf %313, %18 : vector<2x192xf32>
    %315 = vector.extract_strided_slice %314 {offsets = [0, 0], sizes = [2, 96], strides = [1, 1]} : vector<2x192xf32> to vector<2x96xf32>
    %316 = vector.extract_strided_slice %314 {offsets = [0, 96], sizes = [2, 96], strides = [1, 1]} : vector<2x192xf32> to vector<2x96xf32>
    %317 = vector.extract_strided_slice %311 {offsets = [0, 0], sizes = [2, 64], strides = [1, 1]} : vector<2x96xf32> to vector<2x64xf32>
    %318 = vector.extract_strided_slice %315 {offsets = [0, 0], sizes = [2, 64], strides = [1, 1]} : vector<2x96xf32> to vector<2x64xf32>
    %319 = arith.addf %317, %318 : vector<2x64xf32>
    %320 = arith.negf %319 : vector<2x64xf32>
    %321 = math.exp %320 : vector<2x64xf32>
    %cst_55 = arith.constant 1.000000e+00 : f32
    %322 = vector.broadcast %cst_55 : f32 to vector<2x64xf32>
    %323 = arith.addf %322, %321 : vector<2x64xf32>
    %324 = arith.divf %322, %323 : vector<2x64xf32>
    %325 = vector.extract_strided_slice %324 {offsets = [0, 0], sizes = [2, 32], strides = [1, 1]} : vector<2x64xf32> to vector<2x32xf32>
    %326 = vector.extract_strided_slice %324 {offsets = [0, 32], sizes = [2, 32], strides = [1, 1]} : vector<2x64xf32> to vector<2x32xf32>
    %327 = vector.extract_strided_slice %311 {offsets = [0, 64], sizes = [2, 32], strides = [1, 1]} : vector<2x96xf32> to vector<2x32xf32>
    %328 = vector.extract_strided_slice %315 {offsets = [0, 64], sizes = [2, 32], strides = [1, 1]} : vector<2x96xf32> to vector<2x32xf32>
    %329 = arith.mulf %325, %328 : vector<2x32xf32>
    %330 = arith.addf %327, %329 : vector<2x32xf32>
    %331 = math.tanh %330 : vector<2x32xf32>
    %cst_56 = arith.constant 1.000000e+00 : f32
    %332 = vector.broadcast %cst_56 : f32 to vector<2x32xf32>
    %333 = arith.subf %332, %326 : vector<2x32xf32>
    %334 = arith.mulf %333, %331 : vector<2x32xf32>
    %335 = arith.mulf %326, %288 : vector<2x32xf32>
    %336 = arith.addf %334, %335 : vector<2x32xf32>
    %cst_57 = arith.constant dense<0.000000e+00> : vector<2x96xf32>
    %337 = tpu.matmul %336, %20, %cst_57 {dimension_numbers = #tpu.dot_dimension_numbers<[1], [0], [0], [1], [0, 0, 1, 1], [], []>} : vector<2x32xf32>, vector<32x96xf32>, vector<2x96xf32> -> vector<2x96xf32>
    %338 = arith.addf %337, %15 : vector<2x96xf32>
    %339 = vector.extract_strided_slice %338 {offsets = [0, 0], sizes = [2, 64], strides = [1, 1]} : vector<2x96xf32> to vector<2x64xf32>
    %340 = vector.extract_strided_slice %316 {offsets = [0, 0], sizes = [2, 64], strides = [1, 1]} : vector<2x96xf32> to vector<2x64xf32>
    %341 = arith.addf %339, %340 : vector<2x64xf32>
    %342 = arith.negf %341 : vector<2x64xf32>
    %343 = math.exp %342 : vector<2x64xf32>
    %cst_58 = arith.constant 1.000000e+00 : f32
    %344 = vector.broadcast %cst_58 : f32 to vector<2x64xf32>
    %345 = arith.addf %344, %343 : vector<2x64xf32>
    %346 = arith.divf %344, %345 : vector<2x64xf32>
    %347 = vector.extract_strided_slice %346 {offsets = [0, 0], sizes = [2, 32], strides = [1, 1]} : vector<2x64xf32> to vector<2x32xf32>
    %348 = vector.extract_strided_slice %346 {offsets = [0, 32], sizes = [2, 32], strides = [1, 1]} : vector<2x64xf32> to vector<2x32xf32>
    %349 = vector.extract_strided_slice %338 {offsets = [0, 64], sizes = [2, 32], strides = [1, 1]} : vector<2x96xf32> to vector<2x32xf32>
    %350 = vector.extract_strided_slice %316 {offsets = [0, 64], sizes = [2, 32], strides = [1, 1]} : vector<2x96xf32> to vector<2x32xf32>
    %351 = arith.mulf %347, %350 : vector<2x32xf32>
    %352 = arith.addf %349, %351 : vector<2x32xf32>
    %353 = math.tanh %352 : vector<2x32xf32>
    %cst_59 = arith.constant 1.000000e+00 : f32
    %354 = vector.broadcast %cst_59 : f32 to vector<2x32xf32>
    %355 = arith.subf %354, %348 : vector<2x32xf32>
    %356 = arith.mulf %355, %353 : vector<2x32xf32>
    %357 = arith.mulf %348, %310 : vector<2x32xf32>
    %358 = arith.addf %356, %357 : vector<2x32xf32>
    %359 = vector.extract_strided_slice %12 {offsets = [14, 0], sizes = [2, 96], strides = [1, 1]} : vector<16x96xf32> to vector<2x96xf32>
    %360 = tpu.concatenate %336, %358 in 1 : vector<2x32xf32>, vector<2x32xf32> -> vector<2x64xf32>
    %cst_60 = arith.constant dense<0.000000e+00> : vector<2x192xf32>
    %361 = tpu.matmul %360, %19, %cst_60 {dimension_numbers = #tpu.dot_dimension_numbers<[1], [0], [0], [1], [0, 0, 1, 1], [], []>} : vector<2x64xf32>, vector<64x192xf32>, vector<2x192xf32> -> vector<2x192xf32>
    %362 = arith.addf %361, %18 : vector<2x192xf32>
    %363 = vector.extract_strided_slice %362 {offsets = [0, 0], sizes = [2, 96], strides = [1, 1]} : vector<2x192xf32> to vector<2x96xf32>
    %364 = vector.extract_strided_slice %362 {offsets = [0, 96], sizes = [2, 96], strides = [1, 1]} : vector<2x192xf32> to vector<2x96xf32>
    %365 = vector.extract_strided_slice %359 {offsets = [0, 0], sizes = [2, 64], strides = [1, 1]} : vector<2x96xf32> to vector<2x64xf32>
    %366 = vector.extract_strided_slice %363 {offsets = [0, 0], sizes = [2, 64], strides = [1, 1]} : vector<2x96xf32> to vector<2x64xf32>
    %367 = arith.addf %365, %366 : vector<2x64xf32>
    %368 = arith.negf %367 : vector<2x64xf32>
    %369 = math.exp %368 : vector<2x64xf32>
    %cst_61 = arith.constant 1.000000e+00 : f32
    %370 = vector.broadcast %cst_61 : f32 to vector<2x64xf32>
    %371 = arith.addf %370, %369 : vector<2x64xf32>
    %372 = arith.divf %370, %371 : vector<2x64xf32>
    %373 = vector.extract_strided_slice %372 {offsets = [0, 0], sizes = [2, 32], strides = [1, 1]} : vector<2x64xf32> to vector<2x32xf32>
    %374 = vector.extract_strided_slice %372 {offsets = [0, 32], sizes = [2, 32], strides = [1, 1]} : vector<2x64xf32> to vector<2x32xf32>
    %375 = vector.extract_strided_slice %359 {offsets = [0, 64], sizes = [2, 32], strides = [1, 1]} : vector<2x96xf32> to vector<2x32xf32>
    %376 = vector.extract_strided_slice %363 {offsets = [0, 64], sizes = [2, 32], strides = [1, 1]} : vector<2x96xf32> to vector<2x32xf32>
    %377 = arith.mulf %373, %376 : vector<2x32xf32>
    %378 = arith.addf %375, %377 : vector<2x32xf32>
    %379 = math.tanh %378 : vector<2x32xf32>
    %cst_62 = arith.constant 1.000000e+00 : f32
    %380 = vector.broadcast %cst_62 : f32 to vector<2x32xf32>
    %381 = arith.subf %380, %374 : vector<2x32xf32>
    %382 = arith.mulf %381, %379 : vector<2x32xf32>
    %383 = arith.mulf %374, %336 : vector<2x32xf32>
    %384 = arith.addf %382, %383 : vector<2x32xf32>
    %cst_63 = arith.constant dense<0.000000e+00> : vector<2x96xf32>
    %385 = tpu.matmul %384, %20, %cst_63 {dimension_numbers = #tpu.dot_dimension_numbers<[1], [0], [0], [1], [0, 0, 1, 1], [], []>} : vector<2x32xf32>, vector<32x96xf32>, vector<2x96xf32> -> vector<2x96xf32>
    %386 = arith.addf %385, %15 : vector<2x96xf32>
    %387 = vector.extract_strided_slice %386 {offsets = [0, 0], sizes = [2, 64], strides = [1, 1]} : vector<2x96xf32> to vector<2x64xf32>
    %388 = vector.extract_strided_slice %364 {offsets = [0, 0], sizes = [2, 64], strides = [1, 1]} : vector<2x96xf32> to vector<2x64xf32>
    %389 = arith.addf %387, %388 : vector<2x64xf32>
    %390 = arith.negf %389 : vector<2x64xf32>
    %391 = math.exp %390 : vector<2x64xf32>
    %cst_64 = arith.constant 1.000000e+00 : f32
    %392 = vector.broadcast %cst_64 : f32 to vector<2x64xf32>
    %393 = arith.addf %392, %391 : vector<2x64xf32>
    %394 = arith.divf %392, %393 : vector<2x64xf32>
    %395 = vector.extract_strided_slice %394 {offsets = [0, 0], sizes = [2, 32], strides = [1, 1]} : vector<2x64xf32> to vector<2x32xf32>
    %396 = vector.extract_strided_slice %394 {offsets = [0, 32], sizes = [2, 32], strides = [1, 1]} : vector<2x64xf32> to vector<2x32xf32>
    %397 = vector.extract_strided_slice %386 {offsets = [0, 64], sizes = [2, 32], strides = [1, 1]} : vector<2x96xf32> to vector<2x32xf32>
    %398 = vector.extract_strided_slice %364 {offsets = [0, 64], sizes = [2, 32], strides = [1, 1]} : vector<2x96xf32> to vector<2x32xf32>
    %399 = arith.mulf %395, %398 : vector<2x32xf32>
    %400 = arith.addf %397, %399 : vector<2x32xf32>
    %401 = math.tanh %400 : vector<2x32xf32>
    %cst_65 = arith.constant 1.000000e+00 : f32
    %402 = vector.broadcast %cst_65 : f32 to vector<2x32xf32>
    %403 = arith.subf %402, %396 : vector<2x32xf32>
    %404 = arith.mulf %403, %401 : vector<2x32xf32>
    %405 = arith.mulf %396, %358 : vector<2x32xf32>
    %406 = arith.addf %404, %405 : vector<2x32xf32>
    %407 = tpu.concatenate %70, %118, %166, %214, %262, %310, %358, %406 in 0 : vector<2x32xf32>, vector<2x32xf32>, vector<2x32xf32>, vector<2x32xf32>, vector<2x32xf32>, vector<2x32xf32>, vector<2x32xf32>, vector<2x32xf32> -> vector<16x32xf32>
    %c0_66 = arith.constant 0 : index
    %c0_67 = arith.constant 0 : index
    %408 = vector.load %arg9[%c0_66, %c0_67] : memref<16x32xf32, #tpu.memory_space<vmem>>, vector<16x32xf32>
    tpu.vector_store %arg9[%c0_66, %c0_67], %407 {strides = array<i32>} : memref<16x32xf32, #tpu.memory_space<vmem>>, vector<16x32xf32>,
    %409 = tpu.concatenate %384, %406 in 0 : vector<2x32xf32>, vector<2x32xf32> -> vector<4x32xf32>
    %c0_68 = arith.constant 0 : index
    %c0_69 = arith.constant 0 : index
    %410 = vector.load %arg10[%c0_68, %c0_69] : memref<4x32xf32, #tpu.memory_space<vmem>>, vector<4x32xf32>
    tpu.vector_store %arg10[%c0_68, %c0_69], %409 {strides = array<i32>} : memref<4x32xf32, #tpu.memory_space<vmem>>, vector<4x32xf32>,
    return
  }
  func.func @transform_0(%arg0: i32) -> (i32, i32) {
    %c0_i32 = arith.constant 0 : i32
    %c0_i32_0 = arith.constant 0 : i32
    %c0_i32_1 = arith.constant 0 : i32
    return %c0_i32, %c0_i32_0 : i32, i32
  }
  func.func @transform_1(%arg0: i32) -> (i32, i32) {
    %c0_i32 = arith.constant 0 : i32
    %c0_i32_0 = arith.constant 0 : i32
    %c0_i32_1 = arith.constant 0 : i32
    return %c0_i32, %c0_i32_0 : i32, i32
  }
  func.func @transform_2(%arg0: i32) -> (i32, i32) {
    %c0_i32 = arith.constant 0 : i32
    %c0_i32_0 = arith.constant 0 : i32
    %c0_i32_1 = arith.constant 0 : i32
    return %c0_i32, %c0_i32_0 : i32, i32
  }
  func.func @transform_3(%arg0: i32) -> (i32, i32) {
    %c0_i32 = arith.constant 0 : i32
    %c0_i32_0 = arith.constant 0 : i32
    %c0_i32_1 = arith.constant 0 : i32
    return %c0_i32, %c0_i32_0 : i32, i32
  }
  func.func @transform_4(%arg0: i32) -> (i32, i32) {
    %c0_i32 = arith.constant 0 : i32
    %c0_i32_0 = arith.constant 0 : i32
    %c0_i32_1 = arith.constant 0 : i32
    return %c0_i32, %c0_i32_0 : i32, i32
  }
  func.func @transform_5(%arg0: i32) -> (i32, i32) {
    %c0_i32 = arith.constant 0 : i32
    %c0_i32_0 = arith.constant 0 : i32
    %c0_i32_1 = arith.constant 0 : i32
    return %c0_i32, %c0_i32_0 : i32, i32
  }
  func.func @transform_6(%arg0: i32) -> (i32, i32) {
    %c0_i32 = arith.constant 0 : i32
    %c0_i32_0 = arith.constant 0 : i32
    %c0_i32_1 = arith.constant 0 : i32
    return %c0_i32, %c0_i32_0 : i32, i32
  }
  func.func @transform_7(%arg0: i32) -> (i32, i32) {
    %c0_i32 = arith.constant 0 : i32
    %c0_i32_0 = arith.constant 0 : i32
    %c0_i32_1 = arith.constant 0 : i32
    return %c0_i32, %c0_i32_0 : i32, i32
  }
  func.func @transform_8(%arg0: i32) -> (i32, i32) {
    %c0_i32 = arith.constant 0 : i32
    %c0_i32_0 = arith.constant 0 : i32
    %c0_i32_1 = arith.constant 0 : i32
    return %c0_i32, %c0_i32_0 : i32, i32
  }
  func.func @transform_9(%arg0: i32) -> (i32, i32) {
    %c0_i32 = arith.constant 0 : i32
    %c0_i32_0 = arith.constant 0 : i32
    %c0_i32_1 = arith.constant 0 : i32
    return %c0_i32, %c0_i32_0 : i32, i32
  }
}

</mosaic_0001>

<llo_original>
// kernel: tpu_custom_call.1
$region0: #{tpu_custom_call.1}
  #allocation0 [shape = 'u32[]', space=smem, size = 0x4, offset = 0x4, fixed_abs, tag = 'smem constant byte address 0x4 - core index']
  #allocation1 [shape = 'u32[144,128]{1,0:T(1,128)}', space=vmem, size = 0x12000, scoped, tag = 'internal scratch']
  %s0 = inlined_call_operand.vmem [shape: s32[16,1], index: 0, kind: input, shape index: {}]
  %s1 = inlined_call_operand.vmem [shape: f32[128,32], index: 1, kind: input, shape index: {}]
  %s2 = inlined_call_operand.vmem [shape: f32[32,96], index: 2, kind: input, shape index: {}]
  %s3 = inlined_call_operand.vmem [shape: f32[1,96], index: 3, kind: input, shape index: {}]
  %s4 = inlined_call_operand.vmem [shape: f32[32,96], index: 4, kind: input, shape index: {}]
  %s5 = inlined_call_operand.vmem [shape: f32[1,96], index: 5, kind: input, shape index: {}]
  %s6 = inlined_call_operand.vmem [shape: f32[64,192], index: 6, kind: input, shape index: {}]
  %s7 = inlined_call_operand.vmem [shape: f32[1,192], index: 7, kind: input, shape index: {}]
  %s8 = inlined_call_operand.hbm [shape: f32[16,32], index: 8, kind: output, shape index: {0}]
  %s9 = inlined_call_operand.hbm [shape: f32[4,32], index: 9, kind: output, shape index: {1}]
  %10 = xla_tuple %s8, %s9
  %s11 = sld [smem:[#allocation0]]
  $region50: #{tpu_custom_call.1} parent=0
    _
  %s13 = ssub.s32 1, %s11
  %s14 = scalar_select 0, %s13, %s11
  $region1: #{tpu_custom_call.1} parent=0
    #allocation2 [shape = 'u8[8192]{0}', space=vmem, size = 0x2000, scoped, tag = 'output window, operand 0, single buffered']
    #allocation3 [shape = 's32[1]{0}', space=sflag, size = 0x4, scoped, tag = 'scoped memory for tpu_custom_call.1']
    #allocation4 [shape = 'u8[2048]{0}', space=vmem, size = 0x800, scoped, tag = 'output window, operand 1, single buffered']
    #allocation5 [shape = 's32[1]{0}', space=sflag, size = 0x4, scoped, tag = 'scoped memory for tpu_custom_call.1']
    %15 = vsyncpa [#allocation3], 0
    %16 = vsyncpa [#allocation5], 0
    // Predicated region
    $region2: #{tpu_custom_call.1} parent=1 // pred_check
      _
    $region3: #{tpu_custom_call.1} parent=1 // pred_check_branch
      %18 = sbr.rel (0) target = $region5
    $region4: #{tpu_custom_call.1} parent=1 // pred_region
      _
    $region5: #{tpu_custom_call.1} parent=1 // pred_fallthru
      _
    // Predicated region
    $region6: #{tpu_custom_call.1} parent=1 // pred_check
      _
    $region7: #{tpu_custom_call.1} parent=1 // pred_check_branch
      %20 = sbr.rel (0) target = $region9
    $region8: #{tpu_custom_call.1} parent=1 // pred_region
      _
    $region9: #{tpu_custom_call.1} parent=1 // pred_fallthru
      _
    // Predicated region
    $region10: #{tpu_custom_call.1} parent=1 // pred_check
      _
    $region11: #{tpu_custom_call.1} parent=1 // pred_check_branch
      %22 = sbr.rel (0) target = $region13
    $region12: #{tpu_custom_call.1} parent=1 // pred_region
      _
    $region13: #{tpu_custom_call.1} parent=1 // pred_fallthru
      _
    // Predicated region
    $region14: #{tpu_custom_call.1} parent=1 // pred_check
      _
    $region15: #{tpu_custom_call.1} parent=1 // pred_check_branch
      %24 = sbr.rel (0) target = $region17
    $region16: #{tpu_custom_call.1} parent=1 // pred_region
      _
    $region17: #{tpu_custom_call.1} parent=1 // pred_fallthru
      _
    // Predicated region
    $region18: #{tpu_custom_call.1} parent=1 // pred_check
      _
    $region19: #{tpu_custom_call.1} parent=1 // pred_check_branch
      %26 = sbr.rel (0) target = $region21
    $region20: #{tpu_custom_call.1} parent=1 // pred_region
      _
    $region21: #{tpu_custom_call.1} parent=1 // pred_fallthru
      _
    // Predicated region
    $region22: #{tpu_custom_call.1} parent=1 // pred_check
      _
    $region23: #{tpu_custom_call.1} parent=1 // pred_check_branch
      %28 = sbr.rel (0) target = $region25
    $region24: #{tpu_custom_call.1} parent=1 // pred_region
      _
    $region25: #{tpu_custom_call.1} parent=1 // pred_fallthru
      _
    // Predicated region
    $region26: #{tpu_custom_call.1} parent=1 // pred_check
      _
    $region27: #{tpu_custom_call.1} parent=1 // pred_check_branch
      %30 = sbr.rel (0) target = $region29
    $region28: #{tpu_custom_call.1} parent=1 // pred_region
      _
    $region29: #{tpu_custom_call.1} parent=1 // pred_fallthru
      _
    // Predicated region
    $region30: #{tpu_custom_call.1} parent=1 // pred_check
      _
    $region31: #{tpu_custom_call.1} parent=1 // pred_check_branch
      %32 = sbr.rel (0) target = $region33
    $region32: #{tpu_custom_call.1} parent=1 // pred_region
      _
    $region33: #{tpu_custom_call.1} parent=1 // pred_fallthru
      _
    %v33 = vld [vmem:[%s0] sm:$0xff]
    %v34 = vld [vmem:[%s0 + $0x8] sm:$0xff]
    %v35 = vlaneseq
    %v36 = vand.u32 %v35, 127
    %37 = vset.pattern.permute.xlu0 0
    %38 = vperm.xlu0 %37, %v33
    %v39 = vpop.permute.xlu0 %38
    %40 = vset.pattern.permute.xlu0 0
    %41 = vperm.xlu0 %40, %v34
    %v42 = vpop.permute.xlu0 %41
    %vm43 = vcmp.eq.s32.totalorder %v36, %v39
    %vm44 = vcmp.eq.s32.totalorder %v36, %v42
    %v45 = vsel %vm43, 1, 0
    %v46 = vsel %vm44, 1, 0
    %v47 = vcvt.s32.f32 %v45
    %v48 = vcvt.s32.f32 %v46
    %v49 = vld [vmem:[%s1] sm:$0xff]
    %v50 = vld [vmem:[%s1 + $0x8] sm:$0xff]
    %v51 = vld [vmem:[%s1 + $0x10] sm:$0xff]
    %v52 = vld [vmem:[%s1 + $0x18] sm:$0xff]
    %v53 = vld [vmem:[%s1 + $0x20] sm:$0xff]
    %v54 = vld [vmem:[%s1 + $0x28] sm:$0xff]
    %v55 = vld [vmem:[%s1 + $0x30] sm:$0xff]
    %v56 = vld [vmem:[%s1 + $0x38] sm:$0xff]
    %v57 = vld [vmem:[%s1 + $0x40] sm:$0xff]
    %v58 = vld [vmem:[%s1 + $0x48] sm:$0xff]
    %v59 = vld [vmem:[%s1 + $0x50] sm:$0xff]
    %v60 = vld [vmem:[%s1 + $0x58] sm:$0xff]
    %v61 = vld [vmem:[%s1 + $0x60] sm:$0xff]
    %v62 = vld [vmem:[%s1 + $0x68] sm:$0xff]
    %v63 = vld [vmem:[%s1 + $0x70] sm:$0xff]
    %v64 = vld [vmem:[%s1 + $0x78] sm:$0xff]
    %65 = vmatprep.subr.mxu0 0.0
    %66 = vmatpush1.msra.mxu0 %v49
    %67 = vmatprep.subr.mxu0 0.0
    %68 = vmatpush1.msra.mxu0 %v50
    %69 = vmatprep.subr.mxu0 0.0
    %70 = vmatpush1.msra.mxu0 %v51
    %71 = vmatprep.subr.mxu0 0.0
    %72 = vmatpush1.msra.mxu0 %v52
    %73 = vmatprep.subr.mxu0 0.0
    %74 = vmatpush1.msra.mxu0 %v53
    %75 = vmatprep.subr.mxu0 0.0
    %76 = vmatpush1.msra.mxu0 %v54
    %77 = vmatprep.subr.mxu0 0.0
    %78 = vmatpush1.msra.mxu0 %v55
    %79 = vmatprep.subr.mxu0 0.0
    %80 = vmatpush1.msra.mxu0 %v56
    %81 = vmatprep.subr.mxu0 0.0
    %82 = vmatpush1.msra.mxu0 %v57
    %83 = vmatprep.subr.mxu0 0.0
    %84 = vmatpush1.msra.mxu0 %v58
    %85 = vmatprep.subr.mxu0 0.0
    %86 = vmatpush1.msra.mxu0 %v59
    %87 = vmatprep.subr.mxu0 0.0
    %88 = vmatpush1.msra.mxu0 %v60
    %89 = vmatprep.subr.mxu0 0.0
    %90 = vmatpush1.msra.mxu0 %v61
    %91 = vmatprep.subr.mxu0 0.0
    %92 = vmatpush1.msra.mxu0 %v62
    %93 = vmatprep.subr.mxu0 0.0
    %94 = vmatpush1.msra.mxu0 %v63
    %95 = vmatprep.subr.mxu0 0.0
    %96 = vmatpush1.msra.mxu0 %v64
    %97 = vmatprep.subr.mxu0 0.0
    %98 = vmatpush1.msra.mxu0 0.0
    %99 = vmatprep.subr.mxu0 0.0
    %100 = vmatpush1.msra.mxu0 0.0
    %101 = vmatprep.subr.mxu0 0.0
    %102 = vmatpush1.msra.mxu0 0.0
    %103 = vmatprep.subr.mxu0 0.0
    %104 = vmatpush1.msra.mxu0 0.0
    %105 = vmatprep.subr.mxu0 0.0
    %106 = vmatpush1.msra.mxu0 0.0
    %107 = vmatprep.subr.mxu0 0.0
    %108 = vmatpush1.msra.mxu0 0.0
    %109 = vmatprep.subr.mxu0 0.0
    %110 = vmatpush1.msra.mxu0 0.0
    %111 = vmatprep.subr.mxu0 0.0
    %112 = vmatpush1.msra.mxu0 0.0
    %113 = vmatprep.subr.mxu0 0.0
    %114 = vmatpush1.msra.mxu0 0.0
    %115 = vmatprep.subr.mxu0 0.0
    %116 = vmatpush1.msra.mxu0 0.0
    %117 = vmatprep.subr.mxu0 0.0
    %118 = vmatpush1.msra.mxu0 0.0
    %119 = vmatprep.subr.mxu0 0.0
    %120 = vmatpush1.msra.mxu0 0.0
    %121 = vmatprep.subr.mxu0 0.0
    %122 = vmatpush1.msra.mxu0 0.0
    %123 = vmatprep.subr.mxu0 0.0
    %124 = vmatpush1.msra.mxu0 0.0
    %125 = vmatprep.subr.mxu0 0.0
    %126 = vmatpush1.msra.mxu0 0.0
    %127 = vmatprep.subr.mxu0 0.0
    %128 = vmatpush1.msra.mxu0 0.0
    %129 = vmatprep.mubr.f32.mxu0 0.0
    %130 = vmatmul.mubr.f32.gmra.mrb[0].mxu0 %v47
    %v131 = vpop.f32.mrb[0].mxu0
    %v132 = vadd.f32 0.0, %v131
    %v133 = vpop.f32.mrb[0].mxu0
    %134 = vmatprep.mubr.f32.mxu0 0.0
    %135 = vmatmul.mubr.f32.gmra.mrb[0].mxu0 %v48
    %v136 = vpop.f32.mrb[0].mxu0
    %v137 = vadd.f32 0.0, %v136
    %v138 = vpop.f32.mrb[0].mxu0
    %139 = vdwg.mxu0
    %v140 = vld [vmem:[%s2] sm:$0xff]
    %v141 = vld [vmem:[%s2 + $0x8] sm:$0xff]
    %v142 = vld [vmem:[%s2 + $0x10] sm:$0xff]
    %v143 = vld [vmem:[%s2 + $0x18] sm:$0xff]
    %v144 = vld [vmem:[%s3] sm:$0x1]
    %v146 = vlaneseq
    %v147 = vshrl.u32 %v146, 7
    %v148 = vsub.s32 0, %v147
    %v149 = vrot.slane %v144, %v148
    %vm151 = vcmask 261120
    %v153 = vsel %vm151, %v132, 0
    %v156 = vsel %vm151, %v137, 0
    %158 = vmatprep.subr.mxu0 0.0
    %159 = vmatpush1.msra.mxu0 %v140
    %160 = vmatprep.subr.mxu0 0.0
    %161 = vmatpush1.msra.mxu0 %v141
    %162 = vmatprep.subr.mxu0 0.0
    %163 = vmatpush1.msra.mxu0 %v142
    %164 = vmatprep.subr.mxu0 0.0
    %165 = vmatpush1.msra.mxu0 %v143
    %166 = vmatprep.subr.mxu0 0.0
    %167 = vmatpush1.msra.mxu0 0.0
    %168 = vmatprep.subr.mxu0 0.0
    %169 = vmatpush1.msra.mxu0 0.0
    %170 = vmatprep.subr.mxu0 0.0
    %171 = vmatpush1.msra.mxu0 0.0
    %172 = vmatprep.subr.mxu0 0.0
    %173 = vmatpush1.msra.mxu0 0.0
    %174 = vmatprep.subr.mxu0 0.0
    %175 = vmatpush1.msra.mxu0 0.0
    %176 = vmatprep.subr.mxu0 0.0
    %177 = vmatpush1.msra.mxu0 0.0
    %178 = vmatprep.subr.mxu0 0.0
    %179 = vmatpush1.msra.mxu0 0.0
    %180 = vmatprep.subr.mxu0 0.0
    %181 = vmatpush1.msra.mxu0 0.0
    %182 = vmatprep.subr.mxu0 0.0
    %183 = vmatpush1.msra.mxu0 0.0
    %184 = vmatprep.subr.mxu0 0.0
    %185 = vmatpush1.msra.mxu0 0.0
    %186 = vmatprep.subr.mxu0 0.0
    %187 = vmatpush1.msra.mxu0 0.0
    %188 = vmatprep.subr.mxu0 0.0
    %189 = vmatpush1.msra.mxu0 0.0
    %190 = vmatprep.subr.mxu0 0.0
    %191 = vmatpush1.msra.mxu0 0.0
    %192 = vmatprep.subr.mxu0 0.0
    %193 = vmatpush1.msra.mxu0 0.0
    %194 = vmatprep.subr.mxu0 0.0
    %195 = vmatpush1.msra.mxu0 0.0
    %196 = vmatprep.subr.mxu0 0.0
    %197 = vmatpush1.msra.mxu0 0.0
    %198 = vmatprep.subr.mxu0 0.0
    %199 = vmatpush1.msra.mxu0 0.0
    %200 = vmatprep.subr.mxu0 0.0
    %201 = vmatpush1.msra.mxu0 0.0
    %202 = vmatprep.subr.mxu0 0.0
    %203 = vmatpush1.msra.mxu0 0.0
    %204 = vmatprep.subr.mxu0 0.0
    %205 = vmatpush1.msra.mxu0 0.0
    %206 = vmatprep.subr.mxu0 0.0
    %207 = vmatpush1.msra.mxu0 0.0
    %208 = vmatprep.subr.mxu0 0.0
    %209 = vmatpush1.msra.mxu0 0.0
    %210 = vmatprep.subr.mxu0 0.0
    %211 = vmatpush1.msra.mxu0 0.0
    %212 = vmatprep.subr.mxu0 0.0
    %213 = vmatpush1.msra.mxu0 0.0
    %214 = vmatprep.subr.mxu0 0.0
    %215 = vmatpush1.msra.mxu0 0.0
    %216 = vmatprep.subr.mxu0 0.0
    %217 = vmatpush1.msra.mxu0 0.0
    %218 = vmatprep.subr.mxu0 0.0
    %219 = vmatpush1.msra.mxu0 0.0
    %220 = vmatprep.subr.mxu0 0.0
    %221 = vmatpush1.msra.mxu0 0.0
    %222 = vmatprep.mubr.f32.mxu0 0.0
    %223 = vmatmul.mubr.f32.gmra.mrb[0].mxu0 %v153
    %v224 = vpop.f32.mrb[0].mxu0
    %v225 = vadd.f32 %v149, %v224
    %v226 = vpop.f32.mrb[0].mxu0
    %227 = vmatprep.mubr.f32.mxu0 0.0
    %228 = vmatmul.mubr.f32.gmra.mrb[0].mxu0 %v156
    %v229 = vpop.f32.mrb[0].mxu0
    %v230 = vadd.f32 %v149, %v229
    %v231 = vpop.f32.mrb[0].mxu0
    %232 = vdwg.mxu0
    %v233 = vld [vmem:[%s5] sm:$0x1]
    %v235 = vlaneseq
    %v236 = vshrl.u32 %v235, 7
    %v237 = vsub.s32 0, %v236
    %v238 = vrot.slane %v233, %v237
    %v240 = vld [vmem:[%s7] sm:$0x3]
    %v242 = vlaneseq
    %v243 = vshrl.u32 %v242, 7
    %v244 = vsub.s32 0, %v243
    %v245 = vrot.slane %v240, %v244
    %v246 = vlaneseq
    %v247 = vshrl.u32 %v246, 7
    %v248 = vsub.s32 1, %v247
    %v249 = vrot.slane %v240, %v248
    %v252 = vld [vmem:[%s6] sm:$0xff]
    %v253 = vld [vmem:[%s6 + $0x8] sm:$0xff]
    %v254 = vld [vmem:[%s6 + $0x10] sm:$0xff]
    %v255 = vld [vmem:[%s6 + $0x18] sm:$0xff]
    %v256 = vld [vmem:[%s6 + $0x20] sm:$0xff]
    %v257 = vld [vmem:[%s6 + $0x28] sm:$0xff]
    %v258 = vld [vmem:[%s6 + $0x30] sm:$0xff]
    %v259 = vld [vmem:[%s6 + $0x38] sm:$0xff]
    %v260 = vld [vmem:[%s6 + $0x40] sm:$0xff]
    %v261 = vld [vmem:[%s6 + $0x48] sm:$0xff]
    %v262 = vld [vmem:[%s6 + $0x50] sm:$0xff]
    %v263 = vld [vmem:[%s6 + $0x58] sm:$0xff]
    %v264 = vld [vmem:[%s6 + $0x60] sm:$0xff]
    %v265 = vld [vmem:[%s6 + $0x68] sm:$0xff]
    %v266 = vld [vmem:[%s6 + $0x70] sm:$0xff]
    %v267 = vld [vmem:[%s6 + $0x78] sm:$0xff]
    %v268 = vld [vmem:[%s4] sm:$0xff]
    %v269 = vld [vmem:[%s4 + $0x8] sm:$0xff]
    %v270 = vld [vmem:[%s4 + $0x10] sm:$0xff]
    %v271 = vld [vmem:[%s4 + $0x18] sm:$0xff]
    %vm272 = vcmask 523264
    %v274 = vsel %vm272, 0.0, 0
    %276 = vmatprep.subr.mxu0 %v253
    %277 = vmatpush1.msra.mxu0 %v252
    %278 = vmatprep.subr.mxu0 %v255
    %279 = vmatpush1.msra.mxu0 %v254
    %280 = vmatprep.subr.mxu0 %v257
    %281 = vmatpush1.msra.mxu0 %v256
    %282 = vmatprep.subr.mxu0 %v259
    %283 = vmatpush1.msra.mxu0 %v258
    %284 = vmatprep.subr.mxu0 %v261
    %285 = vmatpush1.msra.mxu0 %v260
    %286 = vmatprep.subr.mxu0 %v263
    %287 = vmatpush1.msra.mxu0 %v262
    %288 = vmatprep.subr.mxu0 %v265
    %289 = vmatpush1.msra.mxu0 %v264
    %290 = vmatprep.subr.mxu0 %v267
    %291 = vmatpush1.msra.mxu0 %v266
    %292 = vmatprep.subr.mxu0 0.0
    %293 = vmatpush1.msra.mxu0 0.0
    %294 = vmatprep.subr.mxu0 0.0
    %295 = vmatpush1.msra.mxu0 0.0
    %296 = vmatprep.subr.mxu0 0.0
    %297 = vmatpush1.msra.mxu0 0.0
    %298 = vmatprep.subr.mxu0 0.0
    %299 = vmatpush1.msra.mxu0 0.0
    %300 = vmatprep.subr.mxu0 0.0
    %301 = vmatpush1.msra.mxu0 0.0
    %302 = vmatprep.subr.mxu0 0.0
    %303 = vmatpush1.msra.mxu0 0.0
    %304 = vmatprep.subr.mxu0 0.0
    %305 = vmatpush1.msra.mxu0 0.0
    %306 = vmatprep.subr.mxu0 0.0
    %307 = vmatpush1.msra.mxu0 0.0
    %308 = vmatprep.subr.mxu0 0.0
    %309 = vmatpush1.msra.mxu0 0.0
    %310 = vmatprep.subr.mxu0 0.0
    %311 = vmatpush1.msra.mxu0 0.0
    %312 = vmatprep.subr.mxu0 0.0
    %313 = vmatpush1.msra.mxu0 0.0
    %314 = vmatprep.subr.mxu0 0.0
    %315 = vmatpush1.msra.mxu0 0.0
    %316 = vmatprep.subr.mxu0 0.0
    %317 = vmatpush1.msra.mxu0 0.0
    %318 = vmatprep.subr.mxu0 0.0
    %319 = vmatpush1.msra.mxu0 0.0
    %320 = vmatprep.subr.mxu0 0.0
    %321 = vmatpush1.msra.mxu0 0.0
    %322 = vmatprep.subr.mxu0 0.0
    %323 = vmatpush1.msra.mxu0 0.0
    %324 = vmatprep.subr.mxu0 0.0
    %325 = vmatpush1.msra.mxu0 0.0
    %326 = vmatprep.subr.mxu0 0.0
    %327 = vmatpush1.msra.mxu0 0.0
    %328 = vmatprep.subr.mxu0 0.0
    %329 = vmatpush1.msra.mxu0 0.0
    %330 = vmatprep.subr.mxu0 0.0
    %331 = vmatpush1.msra.mxu0 0.0
    %332 = vmatprep.subr.mxu0 0.0
    %333 = vmatpush1.msra.mxu0 0.0
    %334 = vmatprep.subr.mxu0 0.0
    %335 = vmatpush1.msra.mxu0 0.0
    %336 = vmatprep.subr.mxu0 0.0
    %337 = vmatpush1.msra.mxu0 0.0
    %338 = vmatprep.subr.mxu0 0.0
    %339 = vmatpush1.msra.mxu0 0.0
    %340 = vmatprep.mubr.f32.mxu0 0.0
    %341 = vmatmul.mubr.f32.gmra.mrb[0].mxu0 %v274
    %v342 = vpop.f32.mrb[0].mxu0
    %v343 = vadd.f32 %v245, %v342
    %v344 = vpop.f32.mrb[0].mxu0
    %v345 = vadd.f32 %v249, %v344
    %346 = vdwg.mxu0
    %v347 = vadd.f32 %v225, %v343
    %v348 = vxor.u32 %v347, 2147483648
    %v349 = vmul.f32 %v348, 1.442695
    %v350 = vpow.pop %v349
    %v351 = vadd.f32 %v350, 1.0
    %v352 = vrcp.pop %v351
    %v353 = vmul.f32 1.0, %v352
    %355 = vrot.lane.b32.xlu0 %v343, 64
    %v356 = vpop.permute.xlu0 %355
    %v358 = vmul.f32 %v353, %v356
    %360 = vrot.lane.b32.xlu0 %v358, 64
    %v361 = vpop.permute.xlu0 %360
    %v363 = vadd.f32 %v225, %v361
    %v364 = vtanh.pop %v363
    %v365 = vsub.f32 1.0, %v353
    %367 = vrot.lane.b32.xlu0 %v364, 96
    %v368 = vpop.permute.xlu0 %367
    %v370 = vmul.f32 %v365, %v368
    %v371 = vmul.f32 %v353, 0.0
    %v372 = vadd.f32 %v370, %v371
    %374 = vrot.lane.b32.xlu0 %v372, 96
    %v375 = vpop.permute.xlu0 %374
    %v376 = vsel %vm151, %v375, 0
    %378 = vmatprep.subr.mxu0 0.0
    %379 = vmatpush1.msra.mxu0 %v268
    %380 = vmatprep.subr.mxu0 0.0
    %381 = vmatpush1.msra.mxu0 %v269
    %382 = vmatprep.subr.mxu0 0.0
    %383 = vmatpush1.msra.mxu0 %v270
    %384 = vmatprep.subr.mxu0 0.0
    %385 = vmatpush1.msra.mxu0 %v271
    %386 = vmatprep.subr.mxu0 0.0
    %387 = vmatpush1.msra.mxu0 0.0
    %388 = vmatprep.subr.mxu0 0.0
    %389 = vmatpush1.msra.mxu0 0.0
    %390 = vmatprep.subr.mxu0 0.0
    %391 = vmatpush1.msra.mxu0 0.0
    %392 = vmatprep.subr.mxu0 0.0
    %393 = vmatpush1.msra.mxu0 0.0
    %394 = vmatprep.subr.mxu0 0.0
    %395 = vmatpush1.msra.mxu0 0.0
    %396 = vmatprep.subr.mxu0 0.0
    %397 = vmatpush1.msra.mxu0 0.0
    %398 = vmatprep.subr.mxu0 0.0
    %399 = vmatpush1.msra.mxu0 0.0
    %400 = vmatprep.subr.mxu0 0.0
    %401 = vmatpush1.msra.mxu0 0.0
    %402 = vmatprep.subr.mxu0 0.0
    %403 = vmatpush1.msra.mxu0 0.0
    %404 = vmatprep.subr.mxu0 0.0
    %405 = vmatpush1.msra.mxu0 0.0
    %406 = vmatprep.subr.mxu0 0.0
    %407 = vmatpush1.msra.mxu0 0.0
    %408 = vmatprep.subr.mxu0 0.0
    %409 = vmatpush1.msra.mxu0 0.0
    %410 = vmatprep.subr.mxu0 0.0
    %411 = vmatpush1.msra.mxu0 0.0
    %412 = vmatprep.subr.mxu0 0.0
    %413 = vmatpush1.msra.mxu0 0.0
    %414 = vmatprep.subr.mxu0 0.0
    %415 = vmatpush1.msra.mxu0 0.0
    %416 = vmatprep.subr.mxu0 0.0
    %417 = vmatpush1.msra.mxu0 0.0
    %418 = vmatprep.subr.mxu0 0.0
    %419 = vmatpush1.msra.mxu0 0.0
    %420 = vmatprep.subr.mxu0 0.0
    %421 = vmatpush1.msra.mxu0 0.0
    %422 = vmatprep.subr.mxu0 0.0
    %423 = vmatpush1.msra.mxu0 0.0
    %424 = vmatprep.subr.mxu0 0.0
    %425 = vmatpush1.msra.mxu0 0.0
    %426 = vmatprep.subr.mxu0 0.0
    %427 = vmatpush1.msra.mxu0 0.0
    %428 = vmatprep.subr.mxu0 0.0
    %429 = vmatpush1.msra.mxu0 0.0
    %430 = vmatprep.subr.mxu0 0.0
    %431 = vmatpush1.msra.mxu0 0.0
    %432 = vmatprep.subr.mxu0 0.0
    %433 = vmatpush1.msra.mxu0 0.0
    %434 = vmatprep.subr.mxu0 0.0
    %435 = vmatpush1.msra.mxu0 0.0
    %436 = vmatprep.subr.mxu0 0.0
    %437 = vmatpush1.msra.mxu0 0.0
    %438 = vmatprep.subr.mxu0 0.0
    %439 = vmatpush1.msra.mxu0 0.0
    %440 = vmatprep.subr.mxu0 0.0
    %441 = vmatpush1.msra.mxu0 0.0
    %442 = vmatprep.mubr.f32.mxu0 0.0
    %443 = vmatmul.mubr.f32.gmra.mrb[0].mxu0 %v376
    %v444 = vpop.f32.mrb[0].mxu0
    %v445 = vadd.f32 %v238, %v444
    %v446 = vpop.f32.mrb[0].mxu0
    %447 = vdwg.mxu0
    %449 = vrot.lane.b32.xlu0 %v343, 32
    %v450 = vpop.permute.xlu0 %449
    %451 = vrot.lane.b32.xlu0 %v345, 32
    %v452 = vpop.permute.xlu0 %451
    %v453 = vsel %vm151, %v450, %v452
    %v455 = vadd.f32 %v445, %v453
    %v456 = vxor.u32 %v455, 2147483648
    %v457 = vmul.f32 %v456, 1.442695
    %v458 = vpow.pop %v457
    %v459 = vadd.f32 %v458, 1.0
    %v460 = vrcp.pop %v459
    %v461 = vmul.f32 1.0, %v460
    %462 = vrot.lane.b32.xlu0 %v345, 96
    %v463 = vpop.permute.xlu0 %462
    %v465 = vmul.f32 %v461, %v463
    %467 = vrot.lane.b32.xlu0 %v465, 64
    %v468 = vpop.permute.xlu0 %467
    %v470 = vadd.f32 %v445, %v468
    %v471 = vtanh.pop %v470
    %v472 = vsub.f32 1.0, %v461
    %474 = vrot.lane.b32.xlu0 %v471, 96
    %v475 = vpop.permute.xlu0 %474
    %v477 = vmul.f32 %v472, %v475
    %v478 = vmul.f32 %v461, 0.0
    %v479 = vadd.f32 %v477, %v478
    %v481 = vsel %vm151, %v375, %v479
    %v483 = vsel %vm272, %v481, 0
    %485 = vmatprep.subr.mxu0 %v253
    %486 = vmatpush1.msra.mxu0 %v252
    %487 = vmatprep.subr.mxu0 %v255
    %488 = vmatpush1.msra.mxu0 %v254
    %489 = vmatprep.subr.mxu0 %v257
    %490 = vmatpush1.msra.mxu0 %v256
    %491 = vmatprep.subr.mxu0 %v259
    %492 = vmatpush1.msra.mxu0 %v258
    %493 = vmatprep.subr.mxu0 %v261
    %494 = vmatpush1.msra.mxu0 %v260
    %495 = vmatprep.subr.mxu0 %v263
    %496 = vmatpush1.msra.mxu0 %v262
    %497 = vmatprep.subr.mxu0 %v265
    %498 = vmatpush1.msra.mxu0 %v264
    %499 = vmatprep.subr.mxu0 %v267
    %500 = vmatpush1.msra.mxu0 %v266
    %501 = vmatprep.subr.mxu0 0.0
    %502 = vmatpush1.msra.mxu0 0.0
    %503 = vmatprep.subr.mxu0 0.0
    %504 = vmatpush1.msra.mxu0 0.0
    %505 = vmatprep.subr.mxu0 0.0
    %506 = vmatpush1.msra.mxu0 0.0
    %507 = vmatprep.subr.mxu0 0.0
    %508 = vmatpush1.msra.mxu0 0.0
    %509 = vmatprep.subr.mxu0 0.0
    %510 = vmatpush1.msra.mxu0 0.0
    %511 = vmatprep.subr.mxu0 0.0
    %512 = vmatpush1.msra.mxu0 0.0
    %513 = vmatprep.subr.mxu0 0.0
    %514 = vmatpush1.msra.mxu0 0.0
    %515 = vmatprep.subr.mxu0 0.0
    %516 = vmatpush1.msra.mxu0 0.0
    %517 = vmatprep.subr.mxu0 0.0
    %518 = vmatpush1.msra.mxu0 0.0
    %519 = vmatprep.subr.mxu0 0.0
    %520 = vmatpush1.msra.mxu0 0.0
    %521 = vmatprep.subr.mxu0 0.0
    %522 = vmatpush1.msra.mxu0 0.0
    %523 = vmatprep.subr.mxu0 0.0
    %524 = vmatpush1.msra.mxu0 0.0
    %525 = vmatprep.subr.mxu0 0.0
    %526 = vmatpush1.msra.mxu0 0.0
    %527 = vmatprep.subr.mxu0 0.0
    %528 = vmatpush1.msra.mxu0 0.0
    %529 = vmatprep.subr.mxu0 0.0
    %530 = vmatpush1.msra.mxu0 0.0
    %531 = vmatprep.subr.mxu0 0.0
    %532 = vmatpush1.msra.mxu0 0.0
    %533 = vmatprep.subr.mxu0 0.0
    %534 = vmatpush1.msra.mxu0 0.0
    %535 = vmatprep.subr.mxu0 0.0
    %536 = vmatpush1.msra.mxu0 0.0
    %537 = vmatprep.subr.mxu0 0.0
    %538 = vmatpush1.msra.mxu0 0.0
    %539 = vmatprep.subr.mxu0 0.0
    %540 = vmatpush1.msra.mxu0 0.0
    %541 = vmatprep.subr.mxu0 0.0
    %542 = vmatpush1.msra.mxu0 0.0
    %543 = vmatprep.subr.mxu0 0.0
    %544 = vmatpush1.msra.mxu0 0.0
    %545 = vmatprep.subr.mxu0 0.0
    %546 = vmatpush1.msra.mxu0 0.0
    %547 = vmatprep.subr.mxu0 0.0
    %548 = vmatpush1.msra.mxu0 0.0
    %549 = vmatprep.mubr.f32.mxu0 0.0
    %550 = vmatmul.mubr.f32.gmra.mrb[0].mxu0 %v483
    %v551 = vpop.f32.mrb[0].mxu0
    %v552 = vadd.f32 %v245, %v551
    %v553 = vpop.f32.mrb[0].mxu0
    %v554 = vadd.f32 %v249, %v553
    %555 = vdwg.mxu0
    %v557 = vrot.slane %v552, 6
    %v559 = vadd.f32 %v225, %v557
    %v560 = vxor.u32 %v559, 2147483648
    %v561 = vmul.f32 %v560, 1.442695
    %v562 = vpow.pop %v561
    %v563 = vadd.f32 %v562, 1.0
    %v564 = vrcp.pop %v563
    %v565 = vmul.f32 1.0, %v564
    %566 = vrot.lane.b32.xlu0 %v557, 64
    %v567 = vpop.permute.xlu0 %566
    %v569 = vmul.f32 %v565, %v567
    %571 = vrot.lane.b32.xlu0 %v569, 64
    %v572 = vpop.permute.xlu0 %571
    %v574 = vadd.f32 %v225, %v572
    %v575 = vtanh.pop %v574
    %v576 = vsub.f32 1.0, %v565
    %578 = vrot.lane.b32.xlu0 %v575, 96
    %v579 = vpop.permute.xlu0 %578
    %v581 = vmul.f32 %v576, %v579
    %v582 = vrot.slane %v372, 6
    %v584 = vmul.f32 %v565, %v582
    %v585 = vadd.f32 %v581, %v584
    %v587 = vrot.slane %v585, 2
    %588 = vrot.lane.b32.xlu0 %v587, 96
    %v589 = vpop.permute.xlu0 %588
    %v590 = vsel %vm151, %v589, 0
    %592 = vmatprep.subr.mxu0 0.0
    %593 = vmatpush1.msra.mxu0 %v268
    %594 = vmatprep.subr.mxu0 0.0
    %595 = vmatpush1.msra.mxu0 %v269
    %596 = vmatprep.subr.mxu0 0.0
    %597 = vmatpush1.msra.mxu0 %v270
    %598 = vmatprep.subr.mxu0 0.0
    %599 = vmatpush1.msra.mxu0 %v271
    %600 = vmatprep.subr.mxu0 0.0
    %601 = vmatpush1.msra.mxu0 0.0
    %602 = vmatprep.subr.mxu0 0.0
    %603 = vmatpush1.msra.mxu0 0.0
    %604 = vmatprep.subr.mxu0 0.0
    %605 = vmatpush1.msra.mxu0 0.0
    %606 = vmatprep.subr.mxu0 0.0
    %607 = vmatpush1.msra.mxu0 0.0
    %608 = vmatprep.subr.mxu0 0.0
    %609 = vmatpush1.msra.mxu0 0.0
    %610 = vmatprep.subr.mxu0 0.0
    %611 = vmatpush1.msra.mxu0 0.0
    %612 = vmatprep.subr.mxu0 0.0
    %613 = vmatpush1.msra.mxu0 0.0
    %614 = vmatprep.subr.mxu0 0.0
    %615 = vmatpush1.msra.mxu0 0.0
    %616 = vmatprep.subr.mxu0 0.0
    %617 = vmatpush1.msra.mxu0 0.0
    %618 = vmatprep.subr.mxu0 0.0
    %619 = vmatpush1.msra.mxu0 0.0
    %620 = vmatprep.subr.mxu0 0.0
    %621 = vmatpush1.msra.mxu0 0.0
    %622 = vmatprep.subr.mxu0 0.0
    %623 = vmatpush1.msra.mxu0 0.0
    %624 = vmatprep.subr.mxu0 0.0
    %625 = vmatpush1.msra.mxu0 0.0
    %626 = vmatprep.subr.mxu0 0.0
    %627 = vmatpush1.msra.mxu0 0.0
    %628 = vmatprep.subr.mxu0 0.0
    %629 = vmatpush1.msra.mxu0 0.0
    %630 = vmatprep.subr.mxu0 0.0
    %631 = vmatpush1.msra.mxu0 0.0
    %632 = vmatprep.subr.mxu0 0.0
    %633 = vmatpush1.msra.mxu0 0.0
    %634 = vmatprep.subr.mxu0 0.0
    %635 = vmatpush1.msra.mxu0 0.0
    %636 = vmatprep.subr.mxu0 0.0
    %637 = vmatpush1.msra.mxu0 0.0
    %638 = vmatprep.subr.mxu0 0.0
    %639 = vmatpush1.msra.mxu0 0.0
    %640 = vmatprep.subr.mxu0 0.0
    %641 = vmatpush1.msra.mxu0 0.0
    %642 = vmatprep.subr.mxu0 0.0
    %643 = vmatpush1.msra.mxu0 0.0
    %644 = vmatprep.subr.mxu0 0.0
    %645 = vmatpush1.msra.mxu0 0.0
    %646 = vmatprep.subr.mxu0 0.0
    %647 = vmatpush1.msra.mxu0 0.0
    %648 = vmatprep.subr.mxu0 0.0
    %649 = vmatpush1.msra.mxu0 0.0
    %650 = vmatprep.subr.mxu0 0.0
    %651 = vmatpush1.msra.mxu0 0.0
    %652 = vmatprep.subr.mxu0 0.0
    %653 = vmatpush1.msra.mxu0 0.0
    %654 = vmatprep.subr.mxu0 0.0
    %655 = vmatpush1.msra.mxu0 0.0
    %656 = vmatprep.mubr.f32.mxu0 0.0
    %657 = vmatmul.mubr.f32.gmra.mrb[0].mxu0 %v590
    %v658 = vpop.f32.mrb[0].mxu0
    %v659 = vadd.f32 %v238, %v658
    %v660 = vpop.f32.mrb[0].mxu0
    %661 = vdwg.mxu0
    %663 = vrot.lane.b32.xlu0 %v552, 32
    %v664 = vpop.permute.xlu0 %663
    %665 = vrot.lane.b32.xlu0 %v554, 32
    %v666 = vpop.permute.xlu0 %665
    %v667 = vsel %vm151, %v664, %v666
    %v669 = vadd.f32 %v659, %v667
    %v670 = vxor.u32 %v669, 2147483648
    %v671 = vmul.f32 %v670, 1.442695
    %v672 = vpow.pop %v671
    %v673 = vadd.f32 %v672, 1.0
    %v674 = vrcp.pop %v673
    %v675 = vmul.f32 1.0, %v674
    %676 = vrot.lane.b32.xlu0 %v554, 96
    %v677 = vpop.permute.xlu0 %676
    %v679 = vmul.f32 %v675, %v677
    %681 = vrot.lane.b32.xlu0 %v679, 64
    %v682 = vpop.permute.xlu0 %681
    %v684 = vadd.f32 %v659, %v682
    %v685 = vtanh.pop %v684
    %v686 = vsub.f32 1.0, %v675
    %688 = vrot.lane.b32.xlu0 %v685, 96
    %v689 = vpop.permute.xlu0 %688
    %v691 = vmul.f32 %v686, %v689
    %v692 = vmul.f32 %v675, %v479
    %v693 = vadd.f32 %v691, %v692
    %694 = vrot.lane.b32.xlu0 %v585, 96
    %v695 = vpop.permute.xlu0 %694
    %v698 = vrot.slane %v693, 6
    %v700 = vsel %vm151, %v695, %v698
    %v702 = vrot.slane %v700, 2
    %v703 = vsel %vm272, %v702, 0
    %705 = vmatprep.subr.mxu0 %v253
    %706 = vmatpush1.msra.mxu0 %v252
    %707 = vmatprep.subr.mxu0 %v255
    %708 = vmatpush1.msra.mxu0 %v254
    %709 = vmatprep.subr.mxu0 %v257
    %710 = vmatpush1.msra.mxu0 %v256
    %711 = vmatprep.subr.mxu0 %v259
    %712 = vmatpush1.msra.mxu0 %v258
    %713 = vmatprep.subr.mxu0 %v261
    %714 = vmatpush1.msra.mxu0 %v260
    %715 = vmatprep.subr.mxu0 %v263
    %716 = vmatpush1.msra.mxu0 %v262
    %717 = vmatprep.subr.mxu0 %v265
    %718 = vmatpush1.msra.mxu0 %v264
    %719 = vmatprep.subr.mxu0 %v267
    %720 = vmatpush1.msra.mxu0 %v266
    %721 = vmatprep.subr.mxu0 0.0
    %722 = vmatpush1.msra.mxu0 0.0
    %723 = vmatprep.subr.mxu0 0.0
    %724 = vmatpush1.msra.mxu0 0.0
    %725 = vmatprep.subr.mxu0 0.0
    %726 = vmatpush1.msra.mxu0 0.0
    %727 = vmatprep.subr.mxu0 0.0
    %728 = vmatpush1.msra.mxu0 0.0
    %729 = vmatprep.subr.mxu0 0.0
    %730 = vmatpush1.msra.mxu0 0.0
    %731 = vmatprep.subr.mxu0 0.0
    %732 = vmatpush1.msra.mxu0 0.0
    %733 = vmatprep.subr.mxu0 0.0
    %734 = vmatpush1.msra.mxu0 0.0
    %735 = vmatprep.subr.mxu0 0.0
    %736 = vmatpush1.msra.mxu0 0.0
    %737 = vmatprep.subr.mxu0 0.0
    %738 = vmatpush1.msra.mxu0 0.0
    %739 = vmatprep.subr.mxu0 0.0
    %740 = vmatpush1.msra.mxu0 0.0
    %741 = vmatprep.subr.mxu0 0.0
    %742 = vmatpush1.msra.mxu0 0.0
    %743 = vmatprep.subr.mxu0 0.0
    %744 = vmatpush1.msra.mxu0 0.0
    %745 = vmatprep.subr.mxu0 0.0
    %746 = vmatpush1.msra.mxu0 0.0
    %747 = vmatprep.subr.mxu0 0.0
    %748 = vmatpush1.msra.mxu0 0.0
    %749 = vmatprep.subr.mxu0 0.0
    %750 = vmatpush1.msra.mxu0 0.0
    %751 = vmatprep.subr.mxu0 0.0
    %752 = vmatpush1.msra.mxu0 0.0
    %753 = vmatprep.subr.mxu0 0.0
    %754 = vmatpush1.msra.mxu0 0.0
    %755 = vmatprep.subr.mxu0 0.0
    %756 = vmatpush1.msra.mxu0 0.0
    %757 = vmatprep.subr.mxu0 0.0
    %758 = vmatpush1.msra.mxu0 0.0
    %759 = vmatprep.subr.mxu0 0.0
    %760 = vmatpush1.msra.mxu0 0.0
    %761 = vmatprep.subr.mxu0 0.0
    %762 = vmatpush1.msra.mxu0 0.0
    %763 = vmatprep.subr.mxu0 0.0
    %764 = vmatpush1.msra.mxu0 0.0
    %765 = vmatprep.subr.mxu0 0.0
    %766 = vmatpush1.msra.mxu0 0.0
    %767 = vmatprep.subr.mxu0 0.0
    %768 = vmatpush1.msra.mxu0 0.0
    %769 = vmatprep.mubr.f32.mxu0 0.0
    %770 = vmatmul.mubr.f32.gmra.mrb[0].mxu0 %v703
    %v771 = vpop.f32.mrb[0].mxu0
    %v772 = vadd.f32 %v245, %v771
    %v773 = vpop.f32.mrb[0].mxu0
    %v774 = vadd.f32 %v249, %v773
    %775 = vdwg.mxu0
    %v777 = vrot.slane %v772, 4
    %v779 = vadd.f32 %v225, %v777
    %v780 = vxor.u32 %v779, 2147483648
    %v781 = vmul.f32 %v780, 1.442695
    %v782 = vpow.pop %v781
    %v783 = vadd.f32 %v782, 1.0
    %v784 = vrcp.pop %v783
    %v785 = vmul.f32 1.0, %v784
    %786 = vrot.lane.b32.xlu0 %v777, 64
    %v787 = vpop.permute.xlu0 %786
    %v789 = vmul.f32 %v785, %v787
    %791 = vrot.lane.b32.xlu0 %v789, 64
    %v792 = vpop.permute.xlu0 %791
    %v794 = vadd.f32 %v225, %v792
    %v795 = vtanh.pop %v794
    %v796 = vsub.f32 1.0, %v785
    %798 = vrot.lane.b32.xlu0 %v795, 96
    %v799 = vpop.permute.xlu0 %798
    %v801 = vmul.f32 %v796, %v799
    %v802 = vrot.slane %v585, 6
    %v804 = vmul.f32 %v785, %v802
    %v805 = vadd.f32 %v801, %v804
    %v807 = vrot.slane %v805, 4
    %808 = vrot.lane.b32.xlu0 %v807, 96
    %v809 = vpop.permute.xlu0 %808
    %v810 = vsel %vm151, %v809, 0
    %812 = vmatprep.subr.mxu0 0.0
    %813 = vmatpush1.msra.mxu0 %v268
    %814 = vmatprep.subr.mxu0 0.0
    %815 = vmatpush1.msra.mxu0 %v269
    %816 = vmatprep.subr.mxu0 0.0
    %817 = vmatpush1.msra.mxu0 %v270
    %818 = vmatprep.subr.mxu0 0.0
    %819 = vmatpush1.msra.mxu0 %v271
    %820 = vmatprep.subr.mxu0 0.0
    %821 = vmatpush1.msra.mxu0 0.0
    %822 = vmatprep.subr.mxu0 0.0
    %823 = vmatpush1.msra.mxu0 0.0
    %824 = vmatprep.subr.mxu0 0.0
    %825 = vmatpush1.msra.mxu0 0.0
    %826 = vmatprep.subr.mxu0 0.0
    %827 = vmatpush1.msra.mxu0 0.0
    %828 = vmatprep.subr.mxu0 0.0
    %829 = vmatpush1.msra.mxu0 0.0
    %830 = vmatprep.subr.mxu0 0.0
    %831 = vmatpush1.msra.mxu0 0.0
    %832 = vmatprep.subr.mxu0 0.0
    %833 = vmatpush1.msra.mxu0 0.0
    %834 = vmatprep.subr.mxu0 0.0
    %835 = vmatpush1.msra.mxu0 0.0
    %836 = vmatprep.subr.mxu0 0.0
    %837 = vmatpush1.msra.mxu0 0.0
    %838 = vmatprep.subr.mxu0 0.0
    %839 = vmatpush1.msra.mxu0 0.0
    %840 = vmatprep.subr.mxu0 0.0
    %841 = vmatpush1.msra.mxu0 0.0
    %842 = vmatprep.subr.mxu0 0.0
    %843 = vmatpush1.msra.mxu0 0.0
    %844 = vmatprep.subr.mxu0 0.0
    %845 = vmatpush1.msra.mxu0 0.0
    %846 = vmatprep.subr.mxu0 0.0
    %847 = vmatpush1.msra.mxu0 0.0
    %848 = vmatprep.subr.mxu0 0.0
    %849 = vmatpush1.msra.mxu0 0.0
    %850 = vmatprep.subr.mxu0 0.0
    %851 = vmatpush1.msra.mxu0 0.0
    %852 = vmatprep.subr.mxu0 0.0
    %853 = vmatpush1.msra.mxu0 0.0
    %854 = vmatprep.subr.mxu0 0.0
    %855 = vmatpush1.msra.mxu0 0.0
    %856 = vmatprep.subr.mxu0 0.0
    %857 = vmatpush1.msra.mxu0 0.0
    %858 = vmatprep.subr.mxu0 0.0
    %859 = vmatpush1.msra.mxu0 0.0
    %860 = vmatprep.subr.mxu0 0.0
    %861 = vmatpush1.msra.mxu0 0.0
    %862 = vmatprep.subr.mxu0 0.0
    %863 = vmatpush1.msra.mxu0 0.0
    %864 = vmatprep.subr.mxu0 0.0
    %865 = vmatpush1.msra.mxu0 0.0
    %866 = vmatprep.subr.mxu0 0.0
    %867 = vmatpush1.msra.mxu0 0.0
    %868 = vmatprep.subr.mxu0 0.0
    %869 = vmatpush1.msra.mxu0 0.0
    %870 = vmatprep.subr.mxu0 0.0
    %871 = vmatpush1.msra.mxu0 0.0
    %872 = vmatprep.subr.mxu0 0.0
    %873 = vmatpush1.msra.mxu0 0.0
    %874 = vmatprep.subr.mxu0 0.0
    %875 = vmatpush1.msra.mxu0 0.0
    %876 = vmatprep.mubr.f32.mxu0 0.0
    %877 = vmatmul.mubr.f32.gmra.mrb[0].mxu0 %v810
    %v878 = vpop.f32.mrb[0].mxu0
    %v879 = vadd.f32 %v238, %v878
    %v880 = vpop.f32.mrb[0].mxu0
    %881 = vdwg.mxu0
    %883 = vrot.lane.b32.xlu0 %v772, 32
    %v884 = vpop.permute.xlu0 %883
    %885 = vrot.lane.b32.xlu0 %v774, 32
    %v886 = vpop.permute.xlu0 %885
    %v887 = vsel %vm151, %v884, %v886
    %v889 = vadd.f32 %v879, %v887
    %v890 = vxor.u32 %v889, 2147483648
    %v891 = vmul.f32 %v890, 1.442695
    %v892 = vpow.pop %v891
    %v893 = vadd.f32 %v892, 1.0
    %v894 = vrcp.pop %v893
    %v895 = vmul.f32 1.0, %v894
    %896 = vrot.lane.b32.xlu0 %v774, 96
    %v897 = vpop.permute.xlu0 %896
    %v899 = vmul.f32 %v895, %v897
    %901 = vrot.lane.b32.xlu0 %v899, 64
    %v902 = vpop.permute.xlu0 %901
    %v904 = vadd.f32 %v879, %v902
    %v905 = vtanh.pop %v904
    %v906 = vsub.f32 1.0, %v895
    %908 = vrot.lane.b32.xlu0 %v905, 96
    %v909 = vpop.permute.xlu0 %908
    %v911 = vmul.f32 %v906, %v909
    %v912 = vmul.f32 %v895, %v693
    %v913 = vadd.f32 %v911, %v912
    %914 = vrot.lane.b32.xlu0 %v805, 96
    %v915 = vpop.permute.xlu0 %914
    %v918 = vrot.slane %v913, 4
    %v920 = vsel %vm151, %v915, %v918
    %v922 = vrot.slane %v920, 4
    %v923 = vsel %vm272, %v922, 0
    %925 = vmatprep.subr.mxu0 %v253
    %926 = vmatpush1.msra.mxu0 %v252
    %927 = vmatprep.subr.mxu0 %v255
    %928 = vmatpush1.msra.mxu0 %v254
    %929 = vmatprep.subr.mxu0 %v257
    %930 = vmatpush1.msra.mxu0 %v256
    %931 = vmatprep.subr.mxu0 %v259
    %932 = vmatpush1.msra.mxu0 %v258
    %933 = vmatprep.subr.mxu0 %v261
    %934 = vmatpush1.msra.mxu0 %v260
    %935 = vmatprep.subr.mxu0 %v263
    %936 = vmatpush1.msra.mxu0 %v262
    %937 = vmatprep.subr.mxu0 %v265
    %938 = vmatpush1.msra.mxu0 %v264
    %939 = vmatprep.subr.mxu0 %v267
    %940 = vmatpush1.msra.mxu0 %v266
    %941 = vmatprep.subr.mxu0 0.0
    %942 = vmatpush1.msra.mxu0 0.0
    %943 = vmatprep.subr.mxu0 0.0
    %944 = vmatpush1.msra.mxu0 0.0
    %945 = vmatprep.subr.mxu0 0.0
    %946 = vmatpush1.msra.mxu0 0.0
    %947 = vmatprep.subr.mxu0 0.0
    %948 = vmatpush1.msra.mxu0 0.0
    %949 = vmatprep.subr.mxu0 0.0
    %950 = vmatpush1.msra.mxu0 0.0
    %951 = vmatprep.subr.mxu0 0.0
    %952 = vmatpush1.msra.mxu0 0.0
    %953 = vmatprep.subr.mxu0 0.0
    %954 = vmatpush1.msra.mxu0 0.0
    %955 = vmatprep.subr.mxu0 0.0
    %956 = vmatpush1.msra.mxu0 0.0
    %957 = vmatprep.subr.mxu0 0.0
    %958 = vmatpush1.msra.mxu0 0.0
    %959 = vmatprep.subr.mxu0 0.0
    %960 = vmatpush1.msra.mxu0 0.0
    %961 = vmatprep.subr.mxu0 0.0
    %962 = vmatpush1.msra.mxu0 0.0
    %963 = vmatprep.subr.mxu0 0.0
    %964 = vmatpush1.msra.mxu0 0.0
    %965 = vmatprep.subr.mxu0 0.0
    %966 = vmatpush1.msra.mxu0 0.0
    %967 = vmatprep.subr.mxu0 0.0
    %968 = vmatpush1.msra.mxu0 0.0
    %969 = vmatprep.subr.mxu0 0.0
    %970 = vmatpush1.msra.mxu0 0.0
    %971 = vmatprep.subr.mxu0 0.0
    %972 = vmatpush1.msra.mxu0 0.0
    %973 = vmatprep.subr.mxu0 0.0
    %974 = vmatpush1.msra.mxu0 0.0
    %975 = vmatprep.subr.mxu0 0.0
    %976 = vmatpush1.msra.mxu0 0.0
    %977 = vmatprep.subr.mxu0 0.0
    %978 = vmatpush1.msra.mxu0 0.0
    %979 = vmatprep.subr.mxu0 0.0
    %980 = vmatpush1.msra.mxu0 0.0
    %981 = vmatprep.subr.mxu0 0.0
    %982 = vmatpush1.msra.mxu0 0.0
    %983 = vmatprep.subr.mxu0 0.0
    %984 = vmatpush1.msra.mxu0 0.0
    %985 = vmatprep.subr.mxu0 0.0
    %986 = vmatpush1.msra.mxu0 0.0
    %987 = vmatprep.subr.mxu0 0.0
    %988 = vmatpush1.msra.mxu0 0.0
    %989 = vmatprep.mubr.f32.mxu0 0.0
    %990 = vmatmul.mubr.f32.gmra.mrb[0].mxu0 %v923
    %v991 = vpop.f32.mrb[0].mxu0
    %v992 = vadd.f32 %v245, %v991
    %v993 = vpop.f32.mrb[0].mxu0
    %v994 = vadd.f32 %v249, %v993
    %995 = vdwg.mxu0
    %v997 = vrot.slane %v992, 2
    %v999 = vadd.f32 %v225, %v997
    %v1000 = vxor.u32 %v999, 2147483648
    %v1001 = vmul.f32 %v1000, 1.442695
    %v1002 = vpow.pop %v1001
    %v1003 = vadd.f32 %v1002, 1.0
    %v1004 = vrcp.pop %v1003
    %v1005 = vmul.f32 1.0, %v1004
    %1006 = vrot.lane.b32.xlu0 %v997, 64
    %v1007 = vpop.permute.xlu0 %1006
    %v1009 = vmul.f32 %v1005, %v1007
    %1011 = vrot.lane.b32.xlu0 %v1009, 64
    %v1012 = vpop.permute.xlu0 %1011
    %v1014 = vadd.f32 %v225, %v1012
    %v1015 = vtanh.pop %v1014
    %v1016 = vsub.f32 1.0, %v1005
    %1018 = vrot.lane.b32.xlu0 %v1015, 96
    %v1019 = vpop.permute.xlu0 %1018
    %v1021 = vmul.f32 %v1016, %v1019
    %v1022 = vrot.slane %v805, 6
    %v1024 = vmul.f32 %v1005, %v1022
    %v1025 = vadd.f32 %v1021, %v1024
    %v1027 = vrot.slane %v1025, 6
    %1028 = vrot.lane.b32.xlu0 %v1027, 96
    %v1029 = vpop.permute.xlu0 %1028
    %v1030 = vsel %vm151, %v1029, 0
    %1032 = vmatprep.subr.mxu0 0.0
    %1033 = vmatpush1.msra.mxu0 %v268
    %1034 = vmatprep.subr.mxu0 0.0
    %1035 = vmatpush1.msra.mxu0 %v269
    %1036 = vmatprep.subr.mxu0 0.0
    %1037 = vmatpush1.msra.mxu0 %v270
    %1038 = vmatprep.subr.mxu0 0.0
    %1039 = vmatpush1.msra.mxu0 %v271
    %1040 = vmatprep.subr.mxu0 0.0
    %1041 = vmatpush1.msra.mxu0 0.0
    %1042 = vmatprep.subr.mxu0 0.0
    %1043 = vmatpush1.msra.mxu0 0.0
    %1044 = vmatprep.subr.mxu0 0.0
    %1045 = vmatpush1.msra.mxu0 0.0
    %1046 = vmatprep.subr.mxu0 0.0
    %1047 = vmatpush1.msra.mxu0 0.0
    %1048 = vmatprep.subr.mxu0 0.0
    %1049 = vmatpush1.msra.mxu0 0.0
    %1050 = vmatprep.subr.mxu0 0.0
    %1051 = vmatpush1.msra.mxu0 0.0
    %1052 = vmatprep.subr.mxu0 0.0
    %1053 = vmatpush1.msra.mxu0 0.0
    %1054 = vmatprep.subr.mxu0 0.0
    %1055 = vmatpush1.msra.mxu0 0.0
    %1056 = vmatprep.subr.mxu0 0.0
    %1057 = vmatpush1.msra.mxu0 0.0
    %1058 = vmatprep.subr.mxu0 0.0
    %1059 = vmatpush1.msra.mxu0 0.0
    %1060 = vmatprep.subr.mxu0 0.0
    %1061 = vmatpush1.msra.mxu0 0.0
    %1062 = vmatprep.subr.mxu0 0.0
    %1063 = vmatpush1.msra.mxu0 0.0
    %1064 = vmatprep.subr.mxu0 0.0
    %1065 = vmatpush1.msra.mxu0 0.0
    %1066 = vmatprep.subr.mxu0 0.0
    %1067 = vmatpush1.msra.mxu0 0.0
    %1068 = vmatprep.subr.mxu0 0.0
    %1069 = vmatpush1.msra.mxu0 0.0
    %1070 = vmatprep.subr.mxu0 0.0
    %1071 = vmatpush1.msra.mxu0 0.0
    %1072 = vmatprep.subr.mxu0 0.0
    %1073 = vmatpush1.msra.mxu0 0.0
    %1074 = vmatprep.subr.mxu0 0.0
    %1075 = vmatpush1.msra.mxu0 0.0
    %1076 = vmatprep.subr.mxu0 0.0
    %1077 = vmatpush1.msra.mxu0 0.0
    %1078 = vmatprep.subr.mxu0 0.0
    %1079 = vmatpush1.msra.mxu0 0.0
    %1080 = vmatprep.subr.mxu0 0.0
    %1081 = vmatpush1.msra.mxu0 0.0
    %1082 = vmatprep.subr.mxu0 0.0
    %1083 = vmatpush1.msra.mxu0 0.0
    %1084 = vmatprep.subr.mxu0 0.0
    %1085 = vmatpush1.msra.mxu0 0.0
    %1086 = vmatprep.subr.mxu0 0.0
    %1087 = vmatpush1.msra.mxu0 0.0
    %1088 = vmatprep.subr.mxu0 0.0
    %1089 = vmatpush1.msra.mxu0 0.0
    %1090 = vmatprep.subr.mxu0 0.0
    %1091 = vmatpush1.msra.mxu0 0.0
    %1092 = vmatprep.subr.mxu0 0.0
    %1093 = vmatpush1.msra.mxu0 0.0
    %1094 = vmatprep.subr.mxu0 0.0
    %1095 = vmatpush1.msra.mxu0 0.0
    %1096 = vmatprep.mubr.f32.mxu0 0.0
    %1097 = vmatmul.mubr.f32.gmra.mrb[0].mxu0 %v1030
    %v1098 = vpop.f32.mrb[0].mxu0
    %v1099 = vadd.f32 %v238, %v1098
    %v1100 = vpop.f32.mrb[0].mxu0
    %1101 = vdwg.mxu0
    %1103 = vrot.lane.b32.xlu0 %v992, 32
    %v1104 = vpop.permute.xlu0 %1103
    %1105 = vrot.lane.b32.xlu0 %v994, 32
    %v1106 = vpop.permute.xlu0 %1105
    %v1107 = vsel %vm151, %v1104, %v1106
    %v1109 = vadd.f32 %v1099, %v1107
    %v1110 = vxor.u32 %v1109, 2147483648
    %v1111 = vmul.f32 %v1110, 1.442695
    %v1112 = vpow.pop %v1111
    %v1113 = vadd.f32 %v1112, 1.0
    %v1114 = vrcp.pop %v1113
    %v1115 = vmul.f32 1.0, %v1114
    %1116 = vrot.lane.b32.xlu0 %v994, 96
    %v1117 = vpop.permute.xlu0 %1116
    %v1119 = vmul.f32 %v1115, %v1117
    %1121 = vrot.lane.b32.xlu0 %v1119, 64
    %v1122 = vpop.permute.xlu0 %1121
    %v1124 = vadd.f32 %v1099, %v1122
    %v1125 = vtanh.pop %v1124
    %v1126 = vsub.f32 1.0, %v1115
    %1128 = vrot.lane.b32.xlu0 %v1125, 96
    %v1129 = vpop.permute.xlu0 %1128
    %v1131 = vmul.f32 %v1126, %v1129
    %v1132 = vmul.f32 %v1115, %v913
    %v1133 = vadd.f32 %v1131, %v1132
    %1134 = vrot.lane.b32.xlu0 %v1025, 96
    %v1135 = vpop.permute.xlu0 %1134
    %v1138 = vrot.slane %v1133, 2
    %v1140 = vsel %vm151, %v1135, %v1138
    %v1142 = vrot.slane %v1140, 6
    %v1143 = vsel %vm272, %v1142, 0
    %1145 = vmatprep.subr.mxu0 %v253
    %1146 = vmatpush1.msra.mxu0 %v252
    %1147 = vmatprep.subr.mxu0 %v255
    %1148 = vmatpush1.msra.mxu0 %v254
    %1149 = vmatprep.subr.mxu0 %v257
    %1150 = vmatpush1.msra.mxu0 %v256
    %1151 = vmatprep.subr.mxu0 %v259
    %1152 = vmatpush1.msra.mxu0 %v258
    %1153 = vmatprep.subr.mxu0 %v261
    %1154 = vmatpush1.msra.mxu0 %v260
    %1155 = vmatprep.subr.mxu0 %v263
    %1156 = vmatpush1.msra.mxu0 %v262
    %1157 = vmatprep.subr.mxu0 %v265
    %1158 = vmatpush1.msra.mxu0 %v264
    %1159 = vmatprep.subr.mxu0 %v267
    %1160 = vmatpush1.msra.mxu0 %v266
    %1161 = vmatprep.subr.mxu0 0.0
    %1162 = vmatpush1.msra.mxu0 0.0
    %1163 = vmatprep.subr.mxu0 0.0
    %1164 = vmatpush1.msra.mxu0 0.0
    %1165 = vmatprep.subr.mxu0 0.0
    %1166 = vmatpush1.msra.mxu0 0.0
    %1167 = vmatprep.subr.mxu0 0.0
    %1168 = vmatpush1.msra.mxu0 0.0
    %1169 = vmatprep.subr.mxu0 0.0
    %1170 = vmatpush1.msra.mxu0 0.0
    %1171 = vmatprep.subr.mxu0 0.0
    %1172 = vmatpush1.msra.mxu0 0.0
    %1173 = vmatprep.subr.mxu0 0.0
    %1174 = vmatpush1.msra.mxu0 0.0
    %1175 = vmatprep.subr.mxu0 0.0
    %1176 = vmatpush1.msra.mxu0 0.0
    %1177 = vmatprep.subr.mxu0 0.0
    %1178 = vmatpush1.msra.mxu0 0.0
    %1179 = vmatprep.subr.mxu0 0.0
    %1180 = vmatpush1.msra.mxu0 0.0
    %1181 = vmatprep.subr.mxu0 0.0
    %1182 = vmatpush1.msra.mxu0 0.0
    %1183 = vmatprep.subr.mxu0 0.0
    %1184 = vmatpush1.msra.mxu0 0.0
    %1185 = vmatprep.subr.mxu0 0.0
    %1186 = vmatpush1.msra.mxu0 0.0
    %1187 = vmatprep.subr.mxu0 0.0
    %1188 = vmatpush1.msra.mxu0 0.0
    %1189 = vmatprep.subr.mxu0 0.0
    %1190 = vmatpush1.msra.mxu0 0.0
    %1191 = vmatprep.subr.mxu0 0.0
    %1192 = vmatpush1.msra.mxu0 0.0
    %1193 = vmatprep.subr.mxu0 0.0
    %1194 = vmatpush1.msra.mxu0 0.0
    %1195 = vmatprep.subr.mxu0 0.0
    %1196 = vmatpush1.msra.mxu0 0.0
    %1197 = vmatprep.subr.mxu0 0.0
    %1198 = vmatpush1.msra.mxu0 0.0
    %1199 = vmatprep.subr.mxu0 0.0
    %1200 = vmatpush1.msra.mxu0 0.0
    %1201 = vmatprep.subr.mxu0 0.0
    %1202 = vmatpush1.msra.mxu0 0.0
    %1203 = vmatprep.subr.mxu0 0.0
    %1204 = vmatpush1.msra.mxu0 0.0
    %1205 = vmatprep.subr.mxu0 0.0
    %1206 = vmatpush1.msra.mxu0 0.0
    %1207 = vmatprep.subr.mxu0 0.0
    %1208 = vmatpush1.msra.mxu0 0.0
    %1209 = vmatprep.mubr.f32.mxu0 0.0
    %1210 = vmatmul.mubr.f32.gmra.mrb[0].mxu0 %v1143
    %v1211 = vpop.f32.mrb[0].mxu0
    %v1212 = vadd.f32 %v245, %v1211
    %v1213 = vpop.f32.mrb[0].mxu0
    %v1214 = vadd.f32 %v249, %v1213
    %1215 = vdwg.mxu0
    %v1216 = vadd.f32 %v230, %v1212
    %v1217 = vxor.u32 %v1216, 2147483648
    %v1218 = vmul.f32 %v1217, 1.442695
    %v1219 = vpow.pop %v1218
    %v1220 = vadd.f32 %v1219, 1.0
    %v1221 = vrcp.pop %v1220
    %v1222 = vmul.f32 1.0, %v1221
    %1224 = vrot.lane.b32.xlu0 %v1212, 64
    %v1225 = vpop.permute.xlu0 %1224
    %v1227 = vmul.f32 %v1222, %v1225
    %1229 = vrot.lane.b32.xlu0 %v1227, 64
    %v1230 = vpop.permute.xlu0 %1229
    %v1232 = vadd.f32 %v230, %v1230
    %v1233 = vtanh.pop %v1232
    %v1234 = vsub.f32 1.0, %v1222
    %1236 = vrot.lane.b32.xlu0 %v1233, 96
    %v1237 = vpop.permute.xlu0 %1236
    %v1239 = vmul.f32 %v1234, %v1237
    %v1241 = vmul.f32 %v1222, %v1027
    %v1242 = vadd.f32 %v1239, %v1241
    %1244 = vrot.lane.b32.xlu0 %v1242, 96
    %v1245 = vpop.permute.xlu0 %1244
    %v1246 = vsel %vm151, %v1245, 0
    %1248 = vmatprep.subr.mxu0 0.0
    %1249 = vmatpush1.msra.mxu0 %v268
    %1250 = vmatprep.subr.mxu0 0.0
    %1251 = vmatpush1.msra.mxu0 %v269
    %1252 = vmatprep.subr.mxu0 0.0
    %1253 = vmatpush1.msra.mxu0 %v270
    %1254 = vmatprep.subr.mxu0 0.0
    %1255 = vmatpush1.msra.mxu0 %v271
    %1256 = vmatprep.subr.mxu0 0.0
    %1257 = vmatpush1.msra.mxu0 0.0
    %1258 = vmatprep.subr.mxu0 0.0
    %1259 = vmatpush1.msra.mxu0 0.0
    %1260 = vmatprep.subr.mxu0 0.0
    %1261 = vmatpush1.msra.mxu0 0.0
    %1262 = vmatprep.subr.mxu0 0.0
    %1263 = vmatpush1.msra.mxu0 0.0
    %1264 = vmatprep.subr.mxu0 0.0
    %1265 = vmatpush1.msra.mxu0 0.0
    %1266 = vmatprep.subr.mxu0 0.0
    %1267 = vmatpush1.msra.mxu0 0.0
    %1268 = vmatprep.subr.mxu0 0.0
    %1269 = vmatpush1.msra.mxu0 0.0
    %1270 = vmatprep.subr.mxu0 0.0
    %1271 = vmatpush1.msra.mxu0 0.0
    %1272 = vmatprep.subr.mxu0 0.0
    %1273 = vmatpush1.msra.mxu0 0.0
    %1274 = vmatprep.subr.mxu0 0.0
    %1275 = vmatpush1.msra.mxu0 0.0
    %1276 = vmatprep.subr.mxu0 0.0
    %1277 = vmatpush1.msra.mxu0 0.0
    %1278 = vmatprep.subr.mxu0 0.0
    %1279 = vmatpush1.msra.mxu0 0.0
    %1280 = vmatprep.subr.mxu0 0.0
    %1281 = vmatpush1.msra.mxu0 0.0
    %1282 = vmatprep.subr.mxu0 0.0
    %1283 = vmatpush1.msra.mxu0 0.0
    %1284 = vmatprep.subr.mxu0 0.0
    %1285 = vmatpush1.msra.mxu0 0.0
    %1286 = vmatprep.subr.mxu0 0.0
    %1287 = vmatpush1.msra.mxu0 0.0
    %1288 = vmatprep.subr.mxu0 0.0
    %1289 = vmatpush1.msra.mxu0 0.0
    %1290 = vmatprep.subr.mxu0 0.0
    %1291 = vmatpush1.msra.mxu0 0.0
    %1292 = vmatprep.subr.mxu0 0.0
    %1293 = vmatpush1.msra.mxu0 0.0
    %1294 = vmatprep.subr.mxu0 0.0
    %1295 = vmatpush1.msra.mxu0 0.0
    %1296 = vmatprep.subr.mxu0 0.0
    %1297 = vmatpush1.msra.mxu0 0.0
    %1298 = vmatprep.subr.mxu0 0.0
    %1299 = vmatpush1.msra.mxu0 0.0
    %1300 = vmatprep.subr.mxu0 0.0
    %1301 = vmatpush1.msra.mxu0 0.0
    %1302 = vmatprep.subr.mxu0 0.0
    %1303 = vmatpush1.msra.mxu0 0.0
    %1304 = vmatprep.subr.mxu0 0.0
    %1305 = vmatpush1.msra.mxu0 0.0
    %1306 = vmatprep.subr.mxu0 0.0
    %1307 = vmatpush1.msra.mxu0 0.0
    %1308 = vmatprep.subr.mxu0 0.0
    %1309 = vmatpush1.msra.mxu0 0.0
    %1310 = vmatprep.subr.mxu0 0.0
    %1311 = vmatpush1.msra.mxu0 0.0
    %1312 = vmatprep.mubr.f32.mxu0 0.0
    %1313 = vmatmul.mubr.f32.gmra.mrb[0].mxu0 %v1246
    %v1314 = vpop.f32.mrb[0].mxu0
    %v1315 = vadd.f32 %v238, %v1314
    %v1316 = vpop.f32.mrb[0].mxu0
    %1317 = vdwg.mxu0
    %1319 = vrot.lane.b32.xlu0 %v1212, 32
    %v1320 = vpop.permute.xlu0 %1319
    %1321 = vrot.lane.b32.xlu0 %v1214, 32
    %v1322 = vpop.permute.xlu0 %1321
    %v1323 = vsel %vm151, %v1320, %v1322
    %v1325 = vadd.f32 %v1315, %v1323
    %v1326 = vxor.u32 %v1325, 2147483648
    %v1327 = vmul.f32 %v1326, 1.442695
    %v1328 = vpow.pop %v1327
    %v1329 = vadd.f32 %v1328, 1.0
    %v1330 = vrcp.pop %v1329
    %v1331 = vmul.f32 1.0, %v1330
    %1332 = vrot.lane.b32.xlu0 %v1214, 96
    %v1333 = vpop.permute.xlu0 %1332
    %v1335 = vmul.f32 %v1331, %v1333
    %1337 = vrot.lane.b32.xlu0 %v1335, 64
    %v1338 = vpop.permute.xlu0 %1337
    %v1340 = vadd.f32 %v1315, %v1338
    %v1341 = vtanh.pop %v1340
    %v1342 = vsub.f32 1.0, %v1331
    %1344 = vrot.lane.b32.xlu0 %v1341, 96
    %v1345 = vpop.permute.xlu0 %1344
    %v1347 = vmul.f32 %v1342, %v1345
    %v1348 = vmul.f32 %v1331, %v1133
    %v1349 = vadd.f32 %v1347, %v1348
    %v1351 = vsel %vm151, %v1245, %v1349
    %v1353 = vsel %vm272, %v1351, 0
    %1355 = vmatprep.subr.mxu0 %v253
    %1356 = vmatpush1.msra.mxu0 %v252
    %1357 = vmatprep.subr.mxu0 %v255
    %1358 = vmatpush1.msra.mxu0 %v254
    %1359 = vmatprep.subr.mxu0 %v257
    %1360 = vmatpush1.msra.mxu0 %v256
    %1361 = vmatprep.subr.mxu0 %v259
    %1362 = vmatpush1.msra.mxu0 %v258
    %1363 = vmatprep.subr.mxu0 %v261
    %1364 = vmatpush1.msra.mxu0 %v260
    %1365 = vmatprep.subr.mxu0 %v263
    %1366 = vmatpush1.msra.mxu0 %v262
    %1367 = vmatprep.subr.mxu0 %v265
    %1368 = vmatpush1.msra.mxu0 %v264
    %1369 = vmatprep.subr.mxu0 %v267
    %1370 = vmatpush1.msra.mxu0 %v266
    %1371 = vmatprep.subr.mxu0 0.0
    %1372 = vmatpush1.msra.mxu0 0.0
    %1373 = vmatprep.subr.mxu0 0.0
    %1374 = vmatpush1.msra.mxu0 0.0
    %1375 = vmatprep.subr.mxu0 0.0
    %1376 = vmatpush1.msra.mxu0 0.0
    %1377 = vmatprep.subr.mxu0 0.0
    %1378 = vmatpush1.msra.mxu0 0.0
    %1379 = vmatprep.subr.mxu0 0.0
    %1380 = vmatpush1.msra.mxu0 0.0
    %1381 = vmatprep.subr.mxu0 0.0
    %1382 = vmatpush1.msra.mxu0 0.0
    %1383 = vmatprep.subr.mxu0 0.0
    %1384 = vmatpush1.msra.mxu0 0.0
    %1385 = vmatprep.subr.mxu0 0.0
    %1386 = vmatpush1.msra.mxu0 0.0
    %1387 = vmatprep.subr.mxu0 0.0
    %1388 = vmatpush1.msra.mxu0 0.0
    %1389 = vmatprep.subr.mxu0 0.0
    %1390 = vmatpush1.msra.mxu0 0.0
    %1391 = vmatprep.subr.mxu0 0.0
    %1392 = vmatpush1.msra.mxu0 0.0
    %1393 = vmatprep.subr.mxu0 0.0
    %1394 = vmatpush1.msra.mxu0 0.0
    %1395 = vmatprep.subr.mxu0 0.0
    %1396 = vmatpush1.msra.mxu0 0.0
    %1397 = vmatprep.subr.mxu0 0.0
    %1398 = vmatpush1.msra.mxu0 0.0
    %1399 = vmatprep.subr.mxu0 0.0
    %1400 = vmatpush1.msra.mxu0 0.0
    %1401 = vmatprep.subr.mxu0 0.0
    %1402 = vmatpush1.msra.mxu0 0.0
    %1403 = vmatprep.subr.mxu0 0.0
    %1404 = vmatpush1.msra.mxu0 0.0
    %1405 = vmatprep.subr.mxu0 0.0
    %1406 = vmatpush1.msra.mxu0 0.0
    %1407 = vmatprep.subr.mxu0 0.0
    %1408 = vmatpush1.msra.mxu0 0.0
    %1409 = vmatprep.subr.mxu0 0.0
    %1410 = vmatpush1.msra.mxu0 0.0
    %1411 = vmatprep.subr.mxu0 0.0
    %1412 = vmatpush1.msra.mxu0 0.0
    %1413 = vmatprep.subr.mxu0 0.0
    %1414 = vmatpush1.msra.mxu0 0.0
    %1415 = vmatprep.subr.mxu0 0.0
    %1416 = vmatpush1.msra.mxu0 0.0
    %1417 = vmatprep.subr.mxu0 0.0
    %1418 = vmatpush1.msra.mxu0 0.0
    %1419 = vmatprep.mubr.f32.mxu0 0.0
    %1420 = vmatmul.mubr.f32.gmra.mrb[0].mxu0 %v1353
    %v1421 = vpop.f32.mrb[0].mxu0
    %v1422 = vadd.f32 %v245, %v1421
    %v1423 = vpop.f32.mrb[0].mxu0
    %v1424 = vadd.f32 %v249, %v1423
    %1425 = vdwg.mxu0
    %v1427 = vrot.slane %v1422, 6
    %v1429 = vadd.f32 %v230, %v1427
    %v1430 = vxor.u32 %v1429, 2147483648
    %v1431 = vmul.f32 %v1430, 1.442695
    %v1432 = vpow.pop %v1431
    %v1433 = vadd.f32 %v1432, 1.0
    %v1434 = vrcp.pop %v1433
    %v1435 = vmul.f32 1.0, %v1434
    %1436 = vrot.lane.b32.xlu0 %v1427, 64
    %v1437 = vpop.permute.xlu0 %1436
    %v1439 = vmul.f32 %v1435, %v1437
    %1441 = vrot.lane.b32.xlu0 %v1439, 64
    %v1442 = vpop.permute.xlu0 %1441
    %v1444 = vadd.f32 %v230, %v1442
    %v1445 = vtanh.pop %v1444
    %v1446 = vsub.f32 1.0, %v1435
    %1448 = vrot.lane.b32.xlu0 %v1445, 96
    %v1449 = vpop.permute.xlu0 %1448
    %v1451 = vmul.f32 %v1446, %v1449
    %v1452 = vrot.slane %v1242, 6
    %v1454 = vmul.f32 %v1435, %v1452
    %v1455 = vadd.f32 %v1451, %v1454
    %v1457 = vrot.slane %v1455, 2
    %1458 = vrot.lane.b32.xlu0 %v1457, 96
    %v1459 = vpop.permute.xlu0 %1458
    %v1460 = vsel %vm151, %v1459, 0
    %1462 = vmatprep.subr.mxu0 0.0
    %1463 = vmatpush1.msra.mxu0 %v268
    %1464 = vmatprep.subr.mxu0 0.0
    %1465 = vmatpush1.msra.mxu0 %v269
    %1466 = vmatprep.subr.mxu0 0.0
    %1467 = vmatpush1.msra.mxu0 %v270
    %1468 = vmatprep.subr.mxu0 0.0
    %1469 = vmatpush1.msra.mxu0 %v271
    %1470 = vmatprep.subr.mxu0 0.0
    %1471 = vmatpush1.msra.mxu0 0.0
    %1472 = vmatprep.subr.mxu0 0.0
    %1473 = vmatpush1.msra.mxu0 0.0
    %1474 = vmatprep.subr.mxu0 0.0
    %1475 = vmatpush1.msra.mxu0 0.0
    %1476 = vmatprep.subr.mxu0 0.0
    %1477 = vmatpush1.msra.mxu0 0.0
    %1478 = vmatprep.subr.mxu0 0.0
    %1479 = vmatpush1.msra.mxu0 0.0
    %1480 = vmatprep.subr.mxu0 0.0
    %1481 = vmatpush1.msra.mxu0 0.0
    %1482 = vmatprep.subr.mxu0 0.0
    %1483 = vmatpush1.msra.mxu0 0.0
    %1484 = vmatprep.subr.mxu0 0.0
    %1485 = vmatpush1.msra.mxu0 0.0
    %1486 = vmatprep.subr.mxu0 0.0
    %1487 = vmatpush1.msra.mxu0 0.0
    %1488 = vmatprep.subr.mxu0 0.0
    %1489 = vmatpush1.msra.mxu0 0.0
    %1490 = vmatprep.subr.mxu0 0.0
    %1491 = vmatpush1.msra.mxu0 0.0
    %1492 = vmatprep.subr.mxu0 0.0
    %1493 = vmatpush1.msra.mxu0 0.0
    %1494 = vmatprep.subr.mxu0 0.0
    %1495 = vmatpush1.msra.mxu0 0.0
    %1496 = vmatprep.subr.mxu0 0.0
    %1497 = vmatpush1.msra.mxu0 0.0
    %1498 = vmatprep.subr.mxu0 0.0
    %1499 = vmatpush1.msra.mxu0 0.0
    %1500 = vmatprep.subr.mxu0 0.0
    %1501 = vmatpush1.msra.mxu0 0.0
    %1502 = vmatprep.subr.mxu0 0.0
    %1503 = vmatpush1.msra.mxu0 0.0
    %1504 = vmatprep.subr.mxu0 0.0
    %1505 = vmatpush1.msra.mxu0 0.0
    %1506 = vmatprep.subr.mxu0 0.0
    %1507 = vmatpush1.msra.mxu0 0.0
    %1508 = vmatprep.subr.mxu0 0.0
    %1509 = vmatpush1.msra.mxu0 0.0
    %1510 = vmatprep.subr.mxu0 0.0
    %1511 = vmatpush1.msra.mxu0 0.0
    %1512 = vmatprep.subr.mxu0 0.0
    %1513 = vmatpush1.msra.mxu0 0.0
    %1514 = vmatprep.subr.mxu0 0.0
    %1515 = vmatpush1.msra.mxu0 0.0
    %1516 = vmatprep.subr.mxu0 0.0
    %1517 = vmatpush1.msra.mxu0 0.0
    %1518 = vmatprep.subr.mxu0 0.0
    %1519 = vmatpush1.msra.mxu0 0.0
    %1520 = vmatprep.subr.mxu0 0.0
    %1521 = vmatpush1.msra.mxu0 0.0
    %1522 = vmatprep.subr.mxu0 0.0
    %1523 = vmatpush1.msra.mxu0 0.0
    %1524 = vmatprep.subr.mxu0 0.0
    %1525 = vmatpush1.msra.mxu0 0.0
    %1526 = vmatprep.mubr.f32.mxu0 0.0
    %1527 = vmatmul.mubr.f32.gmra.mrb[0].mxu0 %v1460
    %v1528 = vpop.f32.mrb[0].mxu0
    %v1529 = vadd.f32 %v238, %v1528
    %v1530 = vpop.f32.mrb[0].mxu0
    %1531 = vdwg.mxu0
    %1533 = vrot.lane.b32.xlu0 %v1422, 32
    %v1534 = vpop.permute.xlu0 %1533
    %1535 = vrot.lane.b32.xlu0 %v1424, 32
    %v1536 = vpop.permute.xlu0 %1535
    %v1537 = vsel %vm151, %v1534, %v1536
    %v1539 = vadd.f32 %v1529, %v1537
    %v1540 = vxor.u32 %v1539, 2147483648
    %v1541 = vmul.f32 %v1540, 1.442695
    %v1542 = vpow.pop %v1541
    %v1543 = vadd.f32 %v1542, 1.0
    %v1544 = vrcp.pop %v1543
    %v1545 = vmul.f32 1.0, %v1544
    %1546 = vrot.lane.b32.xlu0 %v1424, 96
    %v1547 = vpop.permute.xlu0 %1546
    %v1549 = vmul.f32 %v1545, %v1547
    %1551 = vrot.lane.b32.xlu0 %v1549, 64
    %v1552 = vpop.permute.xlu0 %1551
    %v1554 = vadd.f32 %v1529, %v1552
    %v1555 = vtanh.pop %v1554
    %v1556 = vsub.f32 1.0, %v1545
    %1558 = vrot.lane.b32.xlu0 %v1555, 96
    %v1559 = vpop.permute.xlu0 %1558
    %v1561 = vmul.f32 %v1556, %v1559
    %v1562 = vmul.f32 %v1545, %v1349
    %v1563 = vadd.f32 %v1561, %v1562
    %1564 = vrot.lane.b32.xlu0 %v1455, 96
    %v1565 = vpop.permute.xlu0 %1564
    %v1568 = vrot.slane %v1563, 6
    %v1570 = vsel %vm151, %v1565, %v1568
    %v1572 = vrot.slane %v1570, 2
    %v1573 = vsel %vm272, %v1572, 0
    %1575 = vmatprep.subr.mxu0 %v253
    %1576 = vmatpush1.msra.mxu0 %v252
    %1577 = vmatprep.subr.mxu0 %v255
    %1578 = vmatpush1.msra.mxu0 %v254
    %1579 = vmatprep.subr.mxu0 %v257
    %1580 = vmatpush1.msra.mxu0 %v256
    %1581 = vmatprep.subr.mxu0 %v259
    %1582 = vmatpush1.msra.mxu0 %v258
    %1583 = vmatprep.subr.mxu0 %v261
    %1584 = vmatpush1.msra.mxu0 %v260
    %1585 = vmatprep.subr.mxu0 %v263
    %1586 = vmatpush1.msra.mxu0 %v262
    %1587 = vmatprep.subr.mxu0 %v265
    %1588 = vmatpush1.msra.mxu0 %v264
    %1589 = vmatprep.subr.mxu0 %v267
    %1590 = vmatpush1.msra.mxu0 %v266
    %1591 = vmatprep.subr.mxu0 0.0
    %1592 = vmatpush1.msra.mxu0 0.0
    %1593 = vmatprep.subr.mxu0 0.0
    %1594 = vmatpush1.msra.mxu0 0.0
    %1595 = vmatprep.subr.mxu0 0.0
    %1596 = vmatpush1.msra.mxu0 0.0
    %1597 = vmatprep.subr.mxu0 0.0
    %1598 = vmatpush1.msra.mxu0 0.0
    %1599 = vmatprep.subr.mxu0 0.0
    %1600 = vmatpush1.msra.mxu0 0.0
    %1601 = vmatprep.subr.mxu0 0.0
    %1602 = vmatpush1.msra.mxu0 0.0
    %1603 = vmatprep.subr.mxu0 0.0
    %1604 = vmatpush1.msra.mxu0 0.0
    %1605 = vmatprep.subr.mxu0 0.0
    %1606 = vmatpush1.msra.mxu0 0.0
    %1607 = vmatprep.subr.mxu0 0.0
    %1608 = vmatpush1.msra.mxu0 0.0
    %1609 = vmatprep.subr.mxu0 0.0
    %1610 = vmatpush1.msra.mxu0 0.0
    %1611 = vmatprep.subr.mxu0 0.0
    %1612 = vmatpush1.msra.mxu0 0.0
    %1613 = vmatprep.subr.mxu0 0.0
    %1614 = vmatpush1.msra.mxu0 0.0
    %1615 = vmatprep.subr.mxu0 0.0
    %1616 = vmatpush1.msra.mxu0 0.0
    %1617 = vmatprep.subr.mxu0 0.0
    %1618 = vmatpush1.msra.mxu0 0.0
    %1619 = vmatprep.subr.mxu0 0.0
    %1620 = vmatpush1.msra.mxu0 0.0
    %1621 = vmatprep.subr.mxu0 0.0
    %1622 = vmatpush1.msra.mxu0 0.0
    %1623 = vmatprep.subr.mxu0 0.0
    %1624 = vmatpush1.msra.mxu0 0.0
    %1625 = vmatprep.subr.mxu0 0.0
    %1626 = vmatpush1.msra.mxu0 0.0
    %1627 = vmatprep.subr.mxu0 0.0
    %1628 = vmatpush1.msra.mxu0 0.0
    %1629 = vmatprep.subr.mxu0 0.0
    %1630 = vmatpush1.msra.mxu0 0.0
    %1631 = vmatprep.subr.mxu0 0.0
    %1632 = vmatpush1.msra.mxu0 0.0
    %1633 = vmatprep.subr.mxu0 0.0
    %1634 = vmatpush1.msra.mxu0 0.0
    %1635 = vmatprep.subr.mxu0 0.0
    %1636 = vmatpush1.msra.mxu0 0.0
    %1637 = vmatprep.subr.mxu0 0.0
    %1638 = vmatpush1.msra.mxu0 0.0
    %1639 = vmatprep.mubr.f32.mxu0 0.0
    %1640 = vmatmul.mubr.f32.gmra.mrb[0].mxu0 %v1573
    %v1641 = vpop.f32.mrb[0].mxu0
    %v1642 = vadd.f32 %v245, %v1641
    %v1643 = vpop.f32.mrb[0].mxu0
    %v1644 = vadd.f32 %v249, %v1643
    %1645 = vdwg.mxu0
    %v1647 = vrot.slane %v1642, 4
    %v1649 = vadd.f32 %v230, %v1647
    %v1650 = vxor.u32 %v1649, 2147483648
    %v1651 = vmul.f32 %v1650, 1.442695
    %v1652 = vpow.pop %v1651
    %v1653 = vadd.f32 %v1652, 1.0
    %v1654 = vrcp.pop %v1653
    %v1655 = vmul.f32 1.0, %v1654
    %1656 = vrot.lane.b32.xlu0 %v1647, 64
    %v1657 = vpop.permute.xlu0 %1656
    %v1659 = vmul.f32 %v1655, %v1657
    %1661 = vrot.lane.b32.xlu0 %v1659, 64
    %v1662 = vpop.permute.xlu0 %1661
    %v1664 = vadd.f32 %v230, %v1662
    %v1665 = vtanh.pop %v1664
    %v1666 = vsub.f32 1.0, %v1655
    %1668 = vrot.lane.b32.xlu0 %v1665, 96
    %v1669 = vpop.permute.xlu0 %1668
    %v1671 = vmul.f32 %v1666, %v1669
    %v1672 = vrot.slane %v1455, 6
    %v1674 = vmul.f32 %v1655, %v1672
    %v1675 = vadd.f32 %v1671, %v1674
    %v1677 = vrot.slane %v1675, 4
    %1678 = vrot.lane.b32.xlu0 %v1677, 96
    %v1679 = vpop.permute.xlu0 %1678
    %v1680 = vsel %vm151, %v1679, 0
    %1682 = vmatprep.subr.mxu0 0.0
    %1683 = vmatpush1.msra.mxu0 %v268
    %1684 = vmatprep.subr.mxu0 0.0
    %1685 = vmatpush1.msra.mxu0 %v269
    %1686 = vmatprep.subr.mxu0 0.0
    %1687 = vmatpush1.msra.mxu0 %v270
    %1688 = vmatprep.subr.mxu0 0.0
    %1689 = vmatpush1.msra.mxu0 %v271
    %1690 = vmatprep.subr.mxu0 0.0
    %1691 = vmatpush1.msra.mxu0 0.0
    %1692 = vmatprep.subr.mxu0 0.0
    %1693 = vmatpush1.msra.mxu0 0.0
    %1694 = vmatprep.subr.mxu0 0.0
    %1695 = vmatpush1.msra.mxu0 0.0
    %1696 = vmatprep.subr.mxu0 0.0
    %1697 = vmatpush1.msra.mxu0 0.0
    %1698 = vmatprep.subr.mxu0 0.0
    %1699 = vmatpush1.msra.mxu0 0.0
    %1700 = vmatprep.subr.mxu0 0.0
    %1701 = vmatpush1.msra.mxu0 0.0
    %1702 = vmatprep.subr.mxu0 0.0
    %1703 = vmatpush1.msra.mxu0 0.0
    %1704 = vmatprep.subr.mxu0 0.0
    %1705 = vmatpush1.msra.mxu0 0.0
    %1706 = vmatprep.subr.mxu0 0.0
    %1707 = vmatpush1.msra.mxu0 0.0
    %1708 = vmatprep.subr.mxu0 0.0
    %1709 = vmatpush1.msra.mxu0 0.0
    %1710 = vmatprep.subr.mxu0 0.0
    %1711 = vmatpush1.msra.mxu0 0.0
    %1712 = vmatprep.subr.mxu0 0.0
    %1713 = vmatpush1.msra.mxu0 0.0
    %1714 = vmatprep.subr.mxu0 0.0
    %1715 = vmatpush1.msra.mxu0 0.0
    %1716 = vmatprep.subr.mxu0 0.0
    %1717 = vmatpush1.msra.mxu0 0.0
    %1718 = vmatprep.subr.mxu0 0.0
    %1719 = vmatpush1.msra.mxu0 0.0
    %1720 = vmatprep.subr.mxu0 0.0
    %1721 = vmatpush1.msra.mxu0 0.0
    %1722 = vmatprep.subr.mxu0 0.0
    %1723 = vmatpush1.msra.mxu0 0.0
    %1724 = vmatprep.subr.mxu0 0.0
    %1725 = vmatpush1.msra.mxu0 0.0
    %1726 = vmatprep.subr.mxu0 0.0
    %1727 = vmatpush1.msra.mxu0 0.0
    %1728 = vmatprep.subr.mxu0 0.0
    %1729 = vmatpush1.msra.mxu0 0.0
    %1730 = vmatprep.subr.mxu0 0.0
    %1731 = vmatpush1.msra.mxu0 0.0
    %1732 = vmatprep.subr.mxu0 0.0
    %1733 = vmatpush1.msra.mxu0 0.0
    %1734 = vmatprep.subr.mxu0 0.0
    %1735 = vmatpush1.msra.mxu0 0.0
    %1736 = vmatprep.subr.mxu0 0.0
    %1737 = vmatpush1.msra.mxu0 0.0
    %1738 = vmatprep.subr.mxu0 0.0
    %1739 = vmatpush1.msra.mxu0 0.0
    %1740 = vmatprep.subr.mxu0 0.0
    %1741 = vmatpush1.msra.mxu0 0.0
    %1742 = vmatprep.subr.mxu0 0.0
    %1743 = vmatpush1.msra.mxu0 0.0
    %1744 = vmatprep.subr.mxu0 0.0
    %1745 = vmatpush1.msra.mxu0 0.0
    %1746 = vmatprep.mubr.f32.mxu0 0.0
    %1747 = vmatmul.mubr.f32.gmra.mrb[0].mxu0 %v1680
    %v1748 = vpop.f32.mrb[0].mxu0
    %v1749 = vadd.f32 %v238, %v1748
    %v1750 = vpop.f32.mrb[0].mxu0
    %1751 = vdwg.mxu0
    %1753 = vrot.lane.b32.xlu0 %v1642, 32
    %v1754 = vpop.permute.xlu0 %1753
    %1755 = vrot.lane.b32.xlu0 %v1644, 32
    %v1756 = vpop.permute.xlu0 %1755
    %v1757 = vsel %vm151, %v1754, %v1756
    %v1759 = vadd.f32 %v1749, %v1757
    %v1760 = vxor.u32 %v1759, 2147483648
    %v1761 = vmul.f32 %v1760, 1.442695
    %v1762 = vpow.pop %v1761
    %v1763 = vadd.f32 %v1762, 1.0
    %v1764 = vrcp.pop %v1763
    %v1765 = vmul.f32 1.0, %v1764
    %1766 = vrot.lane.b32.xlu0 %v1644, 96
    %v1767 = vpop.permute.xlu0 %1766
    %v1769 = vmul.f32 %v1765, %v1767
    %1771 = vrot.lane.b32.xlu0 %v1769, 64
    %v1772 = vpop.permute.xlu0 %1771
    %v1774 = vadd.f32 %v1749, %v1772
    %v1775 = vtanh.pop %v1774
    %v1776 = vsub.f32 1.0, %v1765
    %1778 = vrot.lane.b32.xlu0 %v1775, 96
    %v1779 = vpop.permute.xlu0 %1778
    %v1781 = vmul.f32 %v1776, %v1779
    %v1782 = vmul.f32 %v1765, %v1563
    %v1783 = vadd.f32 %v1781, %v1782
    %1784 = vrot.lane.b32.xlu0 %v1675, 96
    %v1785 = vpop.permute.xlu0 %1784
    %v1788 = vrot.slane %v1783, 4
    %v1790 = vsel %vm151, %v1785, %v1788
    %v1792 = vrot.slane %v1790, 4
    %v1793 = vsel %vm272, %v1792, 0
    %1795 = vmatprep.subr.mxu0 %v253
    %1796 = vmatpush1.msra.mxu0 %v252
    %1797 = vmatprep.subr.mxu0 %v255
    %1798 = vmatpush1.msra.mxu0 %v254
    %1799 = vmatprep.subr.mxu0 %v257
    %1800 = vmatpush1.msra.mxu0 %v256
    %1801 = vmatprep.subr.mxu0 %v259
    %1802 = vmatpush1.msra.mxu0 %v258
    %1803 = vmatprep.subr.mxu0 %v261
    %1804 = vmatpush1.msra.mxu0 %v260
    %1805 = vmatprep.subr.mxu0 %v263
    %1806 = vmatpush1.msra.mxu0 %v262
    %1807 = vmatprep.subr.mxu0 %v265
    %1808 = vmatpush1.msra.mxu0 %v264
    %1809 = vmatprep.subr.mxu0 %v267
    %1810 = vmatpush1.msra.mxu0 %v266
    %1811 = vmatprep.subr.mxu0 0.0
    %1812 = vmatpush1.msra.mxu0 0.0
    %1813 = vmatprep.subr.mxu0 0.0
    %1814 = vmatpush1.msra.mxu0 0.0
    %1815 = vmatprep.subr.mxu0 0.0
    %1816 = vmatpush1.msra.mxu0 0.0
    %1817 = vmatprep.subr.mxu0 0.0
    %1818 = vmatpush1.msra.mxu0 0.0
    %1819 = vmatprep.subr.mxu0 0.0
    %1820 = vmatpush1.msra.mxu0 0.0
    %1821 = vmatprep.subr.mxu0 0.0
    %1822 = vmatpush1.msra.mxu0 0.0
    %1823 = vmatprep.subr.mxu0 0.0
    %1824 = vmatpush1.msra.mxu0 0.0
    %1825 = vmatprep.subr.mxu0 0.0
    %1826 = vmatpush1.msra.mxu0 0.0
    %1827 = vmatprep.subr.mxu0 0.0
    %1828 = vmatpush1.msra.mxu0 0.0
    %1829 = vmatprep.subr.mxu0 0.0
    %1830 = vmatpush1.msra.mxu0 0.0
    %1831 = vmatprep.subr.mxu0 0.0
    %1832 = vmatpush1.msra.mxu0 0.0
    %1833 = vmatprep.subr.mxu0 0.0
    %1834 = vmatpush1.msra.mxu0 0.0
    %1835 = vmatprep.subr.mxu0 0.0
    %1836 = vmatpush1.msra.mxu0 0.0
    %1837 = vmatprep.subr.mxu0 0.0
    %1838 = vmatpush1.msra.mxu0 0.0
    %1839 = vmatprep.subr.mxu0 0.0
    %1840 = vmatpush1.msra.mxu0 0.0
    %1841 = vmatprep.subr.mxu0 0.0
    %1842 = vmatpush1.msra.mxu0 0.0
    %1843 = vmatprep.subr.mxu0 0.0
    %1844 = vmatpush1.msra.mxu0 0.0
    %1845 = vmatprep.subr.mxu0 0.0
    %1846 = vmatpush1.msra.mxu0 0.0
    %1847 = vmatprep.subr.mxu0 0.0
    %1848 = vmatpush1.msra.mxu0 0.0
    %1849 = vmatprep.subr.mxu0 0.0
    %1850 = vmatpush1.msra.mxu0 0.0
    %1851 = vmatprep.subr.mxu0 0.0
    %1852 = vmatpush1.msra.mxu0 0.0
    %1853 = vmatprep.subr.mxu0 0.0
    %1854 = vmatpush1.msra.mxu0 0.0
    %1855 = vmatprep.subr.mxu0 0.0
    %1856 = vmatpush1.msra.mxu0 0.0
    %1857 = vmatprep.subr.mxu0 0.0
    %1858 = vmatpush1.msra.mxu0 0.0
    %1859 = vmatprep.mubr.f32.mxu0 0.0
    %1860 = vmatmul.mubr.f32.gmra.mrb[0].mxu0 %v1793
    %v1861 = vpop.f32.mrb[0].mxu0
    %v1862 = vadd.f32 %v245, %v1861
    %v1863 = vpop.f32.mrb[0].mxu0
    %v1864 = vadd.f32 %v249, %v1863
    %1865 = vdwg.mxu0
    %v1867 = vrot.slane %v1862, 2
    %v1869 = vadd.f32 %v230, %v1867
    %v1870 = vxor.u32 %v1869, 2147483648
    %v1871 = vmul.f32 %v1870, 1.442695
    %v1872 = vpow.pop %v1871
    %v1873 = vadd.f32 %v1872, 1.0
    %v1874 = vrcp.pop %v1873
    %v1875 = vmul.f32 1.0, %v1874
    %1876 = vrot.lane.b32.xlu0 %v1867, 64
    %v1877 = vpop.permute.xlu0 %1876
    %v1879 = vmul.f32 %v1875, %v1877
    %1881 = vrot.lane.b32.xlu0 %v1879, 64
    %v1882 = vpop.permute.xlu0 %1881
    %v1884 = vadd.f32 %v230, %v1882
    %v1885 = vtanh.pop %v1884
    %v1886 = vsub.f32 1.0, %v1875
    %1888 = vrot.lane.b32.xlu0 %v1885, 96
    %v1889 = vpop.permute.xlu0 %1888
    %v1891 = vmul.f32 %v1886, %v1889
    %v1892 = vrot.slane %v1675, 6
    %v1894 = vmul.f32 %v1875, %v1892
    %v1895 = vadd.f32 %v1891, %v1894
    %v1897 = vrot.slane %v1895, 6
    %1898 = vrot.lane.b32.xlu0 %v1897, 96
    %v1899 = vpop.permute.xlu0 %1898
    %v1900 = vsel %vm151, %v1899, 0
    %1902 = vmatprep.subr.mxu0 0.0
    %1903 = vmatpush1.msra.mxu0 %v268
    %1904 = vmatprep.subr.mxu0 0.0
    %1905 = vmatpush1.msra.mxu0 %v269
    %1906 = vmatprep.subr.mxu0 0.0
    %1907 = vmatpush1.msra.mxu0 %v270
    %1908 = vmatprep.subr.mxu0 0.0
    %1909 = vmatpush1.msra.mxu0 %v271
    %1910 = vmatprep.subr.mxu0 0.0
    %1911 = vmatpush1.msra.mxu0 0.0
    %1912 = vmatprep.subr.mxu0 0.0
    %1913 = vmatpush1.msra.mxu0 0.0
    %1914 = vmatprep.subr.mxu0 0.0
    %1915 = vmatpush1.msra.mxu0 0.0
    %1916 = vmatprep.subr.mxu0 0.0
    %1917 = vmatpush1.msra.mxu0 0.0
    %1918 = vmatprep.subr.mxu0 0.0
    %1919 = vmatpush1.msra.mxu0 0.0
    %1920 = vmatprep.subr.mxu0 0.0
    %1921 = vmatpush1.msra.mxu0 0.0
    %1922 = vmatprep.subr.mxu0 0.0
    %1923 = vmatpush1.msra.mxu0 0.0
    %1924 = vmatprep.subr.mxu0 0.0
    %1925 = vmatpush1.msra.mxu0 0.0
    %1926 = vmatprep.subr.mxu0 0.0
    %1927 = vmatpush1.msra.mxu0 0.0
    %1928 = vmatprep.subr.mxu0 0.0
    %1929 = vmatpush1.msra.mxu0 0.0
    %1930 = vmatprep.subr.mxu0 0.0
    %1931 = vmatpush1.msra.mxu0 0.0
    %1932 = vmatprep.subr.mxu0 0.0
    %1933 = vmatpush1.msra.mxu0 0.0
    %1934 = vmatprep.subr.mxu0 0.0
    %1935 = vmatpush1.msra.mxu0 0.0
    %1936 = vmatprep.subr.mxu0 0.0
    %1937 = vmatpush1.msra.mxu0 0.0
    %1938 = vmatprep.subr.mxu0 0.0
    %1939 = vmatpush1.msra.mxu0 0.0
    %1940 = vmatprep.subr.mxu0 0.0
    %1941 = vmatpush1.msra.mxu0 0.0
    %1942 = vmatprep.subr.mxu0 0.0
    %1943 = vmatpush1.msra.mxu0 0.0
    %1944 = vmatprep.subr.mxu0 0.0
    %1945 = vmatpush1.msra.mxu0 0.0
    %1946 = vmatprep.subr.mxu0 0.0
    %1947 = vmatpush1.msra.mxu0 0.0
    %1948 = vmatprep.subr.mxu0 0.0
    %1949 = vmatpush1.msra.mxu0 0.0
    %1950 = vmatprep.subr.mxu0 0.0
    %1951 = vmatpush1.msra.mxu0 0.0
    %1952 = vmatprep.subr.mxu0 0.0
    %1953 = vmatpush1.msra.mxu0 0.0
    %1954 = vmatprep.subr.mxu0 0.0
    %1955 = vmatpush1.msra.mxu0 0.0
    %1956 = vmatprep.subr.mxu0 0.0
    %1957 = vmatpush1.msra.mxu0 0.0
    %1958 = vmatprep.subr.mxu0 0.0
    %1959 = vmatpush1.msra.mxu0 0.0
    %1960 = vmatprep.subr.mxu0 0.0
    %1961 = vmatpush1.msra.mxu0 0.0
    %1962 = vmatprep.subr.mxu0 0.0
    %1963 = vmatpush1.msra.mxu0 0.0
    %1964 = vmatprep.subr.mxu0 0.0
    %1965 = vmatpush1.msra.mxu0 0.0
    %1966 = vmatprep.mubr.f32.mxu0 0.0
    %1967 = vmatmul.mubr.f32.gmra.mrb[0].mxu0 %v1900
    %v1968 = vpop.f32.mrb[0].mxu0
    %v1969 = vadd.f32 %v238, %v1968
    %v1970 = vpop.f32.mrb[0].mxu0
    %1971 = vdwg.mxu0
    %1973 = vrot.lane.b32.xlu0 %v1862, 32
    %v1974 = vpop.permute.xlu0 %1973
    %1975 = vrot.lane.b32.xlu0 %v1864, 32
    %v1976 = vpop.permute.xlu0 %1975
    %v1977 = vsel %vm151, %v1974, %v1976
    %v1979 = vadd.f32 %v1969, %v1977
    %v1980 = vxor.u32 %v1979, 2147483648
    %v1981 = vmul.f32 %v1980, 1.442695
    %v1982 = vpow.pop %v1981
    %v1983 = vadd.f32 %v1982, 1.0
    %v1984 = vrcp.pop %v1983
    %v1985 = vmul.f32 1.0, %v1984
    %1986 = vrot.lane.b32.xlu0 %v1864, 96
    %v1987 = vpop.permute.xlu0 %1986
    %v1989 = vmul.f32 %v1985, %v1987
    %1991 = vrot.lane.b32.xlu0 %v1989, 64
    %v1992 = vpop.permute.xlu0 %1991
    %v1994 = vadd.f32 %v1969, %v1992
    %v1995 = vtanh.pop %v1994
    %v1996 = vsub.f32 1.0, %v1985
    %1998 = vrot.lane.b32.xlu0 %v1995, 96
    %v1999 = vpop.permute.xlu0 %1998
    %v2001 = vmul.f32 %v1996, %v1999
    %v2002 = vmul.f32 %v1985, %v1783
    %v2003 = vadd.f32 %v2001, %v2002
    %v2005 = vrot.slane %v2003, 2
    %vm2007 = vcmask 1041408
    %v2008 = vsel %vm2007, %v479, %v698
    %vm2009 = vcmask 1043456
    %v2010 = vsel %vm2009, %v2008, %v918
    %vm2011 = vcmask 1045504
    %v2012 = vsel %vm2011, %v2010, %v1138
    %v2013 = vsel %vm2007, %v1349, %v1568
    %v2014 = vsel %vm2009, %v2013, %v1788
    %v2015 = vsel %vm2011, %v2014, %v2005
    %2018 = vrot.lane.b32.xlu0 %v2012, 96
    %v2019 = vpop.permute.xlu0 %2018
    %2020 = vrot.lane.b32.xlu0 %v2015, 96
    %v2021 = vpop.permute.xlu0 %2020
    %2024 = vst.msk [vmem:[#allocation2] sm:$0xff] %vm151, %v2019
    %2025 = vst.msk [vmem:[#allocation2 + $0x8] sm:$0xff] %vm151, %v2021
    %v2027 = vrot.slane %v2003, 6
    %v2029 = vsel %vm2007, %v1897, %v2027
    %2031 = vrot.lane.b32.xlu0 %v2029, 96
    %v2032 = vpop.permute.xlu0 %2031
    %vm2034 = vcmask 257024
    %2035 = vst.msk [vmem:[#allocation4] sm:$0xf] %vm2034, %v2032
    // Predicated region
    $region34: #{tpu_custom_call.1} parent=1 // pred_check
      _
    $region35: #{tpu_custom_call.1} parent=1 // pred_check_branch
      %2037 = sbr.rel (0) target = $region37
    $region36: #{tpu_custom_call.1} parent=1 // pred_region
      %s2039 = ssub.s32 256, 256
      %2040 = vsyncadd [#allocation3], %s2039
      %s2041 = sshll.u32 [#allocation2], 4
      %s2042 = int_to_ptr.vmem [resolvable:$true] %s2041
      %2047 = dma.vmem_to_hbm [thread:$0]  %s2042, 256, %s8, [#allocation3], 128, 128, 8
    $region37: #{tpu_custom_call.1} parent=1 // pred_fallthru
      _
    // Predicated region
    $region38: #{tpu_custom_call.1} parent=1 // pred_check
      _
    $region39: #{tpu_custom_call.1} parent=1 // pred_check_branch
      %2049 = sbr.rel (0) target = $region41
    $region40: #{tpu_custom_call.1} parent=1 // pred_region
      %s2051 = ssub.s32 64, 64
      %2052 = vsyncadd [#allocation5], %s2051
      %s2054 = sshll.u32 [#allocation4], 4
      %s2055 = int_to_ptr.vmem [resolvable:$true] %s2054
      %2057 = dma.vmem_to_hbm [thread:$0]  %s2055, 64, %s9, [#allocation5]
    $region41: #{tpu_custom_call.1} parent=1 // pred_fallthru
      _
    // Predicated region
    $region42: #{tpu_custom_call.1} parent=1 // pred_check
      _
    $region43: #{tpu_custom_call.1} parent=1 // pred_check_branch
      %2059 = sbr.rel (0) target = $region45
    $region44: #{tpu_custom_call.1} parent=1 // pred_region
      %2060 = dma.done [#allocation3], 256
    $region45: #{tpu_custom_call.1} parent=1 // pred_fallthru
      _
    // Predicated region
    $region46: #{tpu_custom_call.1} parent=1 // pred_check
      _
    $region47: #{tpu_custom_call.1} parent=1 // pred_check_branch
      %2062 = sbr.rel (0) target = $region49
    $region48: #{tpu_custom_call.1} parent=1 // pred_region
      %2063 = dma.done [#allocation5], 64
    $region49: #{tpu_custom_call.1} parent=1 // pred_fallthru
      _
    %2064 = vsyncpa [#allocation3], 1
    %2065 = vsyncpa [#allocation5], 1

</llo_original>
